<compile_context>
chip_gen: v6e
topology: v6e:2x2x1
jax: 0.10.0
libtpu: 0.0.40
codegen_flags: <defaults>
</compile_context>

<pallas_src>
import math
from functools import partial

import jax
import jax.numpy as jnp
from jax import lax
from jax.experimental import pallas as pl
from jax.experimental.pallas import tpu as pltpu


# ---------------------------------------------------------------------------
# Pass 1: per-head QKV projection (runs exactly once per token).
# ---------------------------------------------------------------------------
def _qkv_proj_kernel(x_ref, wq_ref, wk_ref, wv_ref, q_ref, k_ref, v_ref, *,
                     compute_dtype):
    # x_ref : (1, Ts, E)      wq/wk/wv_ref : (H, E, d)      q/k/v_ref : (1, H, Ts, d)
    x = x_ref[0].astype(compute_dtype)                                  # (Ts, E)
    q_ref[0] = jnp.einsum('se,hed->hsd', x, wq_ref[...],
                          preferred_element_type=jnp.float32).astype(q_ref.dtype)
    k_ref[0] = jnp.einsum('se,hed->hsd', x, wk_ref[...],
                          preferred_element_type=jnp.float32).astype(k_ref.dtype)
    v_ref[0] = jnp.einsum('se,hed->hsd', x, wv_ref[...],
                          preferred_element_type=jnp.float32).astype(v_ref.dtype)


# ---------------------------------------------------------------------------
# Pass 2: flash attention (online softmax) + fused output projection.
# ---------------------------------------------------------------------------
def _flash_attn_kernel(q_ref, k_ref, v_ref, wo_ref, *rest,
                       mask_kind, num_heads, fuse_out_proj, compute_dtype):
    # q_ref : (1, H, Tq, d)   k_ref/v_ref : (1, H, Tkv, d)
    # wo_ref: (E, E) if fuse_out_proj else (H, d, E)
    # rest  : ([mask_ref], o_ref, m_s, l_s, acc_s)
    if mask_kind in ("future", "padding"):
        mask_ref, o_ref, m_s, l_s, acc_s = rest
    else:
        mask_ref = None
        o_ref, m_s, l_s, acc_s = rest

    cdt = compute_dtype
    neg = jnp.float32(-1e30)          # finite "minus infinity": no NaN on masked rows
    qi = pl.program_id(1)
    kv_i = pl.program_id(2)
    blk_q = q_ref.shape[2]
    blk_k = k_ref.shape[2]

    @pl.when(kv_i == 0)
    def _init():
        m_s[...] = jnp.full_like(m_s, neg)
        l_s[...] = jnp.zeros_like(l_s)
        acc_s[...] = jnp.zeros_like(acc_s)

    def _attend():
        k = k_ref[0]                                                     # (H, Tkv, d)
        v = v_ref[0]
        # Scaled logits (scale already folded into Wq at projection time), f32.
        s = jnp.einsum('hqd,hkd->hqk', q_ref[0], k,
                       preferred_element_type=jnp.float32)               # (H, Tq, Tkv)

        if mask_kind == "future":
            keep = mask_ref[...]                                         # (Tq, Tkv)
            s_m = jnp.where(keep[None, :, :] != 0, s, neg)
        elif mask_kind == "padding":
            keep = mask_ref[0, 0:1, :]                                   # (1, Tkv)
            s_m = jnp.where(keep[None, :, :] != 0, s, neg)
        elif mask_kind == "causal":
            row = qi * blk_q + lax.broadcasted_iota(jnp.int32, (blk_q, blk_k), 0)
            col = kv_i * blk_k + lax.broadcasted_iota(jnp.int32, (blk_q, blk_k), 1)
            s_m = jnp.where((row >= col)[None, :, :], s, neg)
        else:
            s_m = s

        # Online softmax update (all in f32).
        m_prev = m_s[...]
        m_new = jnp.maximum(m_prev, jnp.max(s_m, axis=-1, keepdims=True))
        alpha = jnp.exp(m_prev - m_new)
        p = jnp.exp(s_m - m_new)
        l_s[...] = alpha * l_s[...] + jnp.sum(p, axis=-1, keepdims=True)
        acc_s[...] = alpha * acc_s[...] + jnp.einsum(
            'hqk,hkd->hqd', p.astype(cdt), v, preferred_element_type=jnp.float32)
        m_s[...] = m_new

    if mask_kind == "causal":
        # Compute only kv tiles that touch the diagonal or below.
        pl.when(kv_i * blk_k <= qi * blk_q + (blk_q - 1))(_attend)
    else:
        _attend()

    @pl.when(kv_i == pl.num_programs(2) - 1)
    def _finalize():
        vals = acc_s[...] * pl.reciprocal(l_s[...], approx=True)         # (H, Tq, d)
        # Rows whose keys were ALL masked never raised the running max: zero them
        # (reference would NaN there).
        vals = jnp.where(m_s[...] > neg, vals, 0.0).astype(cdt)
        if fuse_out_proj:
            # d % 128 == 0: lane-aligned head concat -> one full-depth (Tq,E)@(E,E).
            cat = jnp.concatenate([vals[h] for h in range(num_heads)], axis=-1)
            out = jnp.dot(cat, wo_ref[...], preferred_element_type=jnp.float32)
        else:
            # Small head dims: per-head accumulation (layout-safe, amortized over nkv).
            out = jnp.dot(vals[0], wo_ref[0], preferred_element_type=jnp.float32)
            for h in range(1, num_heads):
                out = out + jnp.dot(vals[h], wo_ref[h],
                                    preferred_element_type=jnp.float32)
        o_ref[0] = out.astype(o_ref.dtype)


# ---------------------------------------------------------------------------
# Host wrapper.
# ---------------------------------------------------------------------------
def _choose_tile(dim, cap, align):
    """Largest tile <= cap that divides dim and is a multiple of `align`
    (falls back to the full dim, which always satisfies the layout rule)."""
    if dim <= cap:
        return dim
    t = (cap // align) * align
    while t >= align:
        if dim % t == 0:
            return t
        t -= align
    return dim


def _vmem_limit(nbytes):
    """Scoped-VMEM limit from an actual-byte estimate, clamped to sane bounds."""
    return max(32 << 20, min(int(nbytes * 1.3) + (8 << 20), 96 << 20))


def multi_head_attention(x, w_qkv, w_o, num_heads,
                         encoder_hidden_states=None,
                         src_padding_mask=None, future_mask=None,
                         causal=False,
                         compute_dtype=jnp.bfloat16,
                         q_tile=128, kv_tile=512, proj_tile=256,
                         vmem_limit_bytes=None):
    """Self-attention forward pass matching the PyTorch module (see TODOs above).

    x:      (N, S, E) float32
    w_qkv:  (3*E, E)  float32   fused qkv_proj.weight (PyTorch layout)
    w_o:    (E, E)    float32   o_proj.weight (PyTorch layout)
    src_padding_mask: optional (N, S) bool (True = keep)
    future_mask:      optional (S, S) bool (True = keep)
    causal: build the lower-triangular mask in-kernel (no mask streamed; above-
            diagonal kv tiles are compute-skipped and their DMA is clamped away).
    compute_dtype: MXU operand dtype (bf16 default, f32 accumulation/softmax).
    Tile defaults are sized for v7x's 64 MiB VMEM; raise q_tile/kv_tile (and
    vmem_limit_bytes) on v5e's 128 MiB VMEM.
    """
    if encoder_hidden_states is not None:
        # TODO(synk): cross-attention projection split not implemented.
        raise NotImplementedError("cross-attention path not implemented")

    N, S, E = x.shape
    H = num_heads
    assert E % H == 0
    d = E // H
    cdt = jnp.dtype(compute_dtype)
    csz = cdt.itemsize
    xsz = jnp.dtype(x.dtype).itemsize
    sub_align = 8 * max(1, 4 // csz)          # 8 for f32, 16 for bf16 (sublane packing)

    # Replicate the reference qkv split: reshape(3E,E) -> (H, 3d, E), chunk rows.
    w_resh = w_qkv.reshape(H, 3 * d, E)
    wq = (jnp.transpose(w_resh[:, :d, :], (0, 2, 1))
          * (1.0 / math.sqrt(d))).astype(cdt)                 # (H,E,d), scale folded
    wk = jnp.transpose(w_resh[:, d:2 * d, :], (0, 2, 1)).astype(cdt)   # (H,E,d)
    wv = jnp.transpose(w_resh[:, 2 * d:, :], (0, 2, 1)).astype(cdt)    # (H,E,d)

    # Head-concat output projection weight (see TODO about the reference reshape).
    fuse_out_proj = (d % 128 == 0)
    if fuse_out_proj:
        wo = jnp.transpose(w_o).astype(cdt)                   # (E, E)
    else:
        wo = jnp.transpose(w_o).reshape(H, d, E).astype(cdt)  # (H, d, E)

    # ---------------- Pass 1: Q/K/V projection (once per token) ----------------
    Ts = _choose_tile(S, proj_tile, sub_align)
    ns = S // Ts
    proj_est = (2 * Ts * E * xsz                 # x tile, double-buffered
                + 2 * 3 * H * E * d * csz        # resident weights (x2 buffers)
                + 2 * 3 * H * Ts * d * csz       # three output tiles
                + 2 * H * Ts * max(d, 128) * 4)  # matmul intermediates
    qkv_shape = jax.ShapeDtypeStruct((N, H, S, d), cdt)
    q_all, k_all, v_all = pl.pallas_call(
        partial(_qkv_proj_kernel, compute_dtype=cdt),
        out_shape=(qkv_shape, qkv_shape, qkv_shape),
        grid_spec=pltpu.PrefetchScalarGridSpec(
            num_scalar_prefetch=0,
            grid=(N, ns),
            in_specs=[
                pl.BlockSpec((1, Ts, E), lambda b, si: (b, si, 0)),
                pl.BlockSpec((H, E, d), lambda b, si: (0, 0, 0)),
                pl.BlockSpec((H, E, d), lambda b, si: (0, 0, 0)),
                pl.BlockSpec((H, E, d), lambda b, si: (0, 0, 0)),
            ],
            out_specs=[
                pl.BlockSpec((1, H, Ts, d), lambda b, si: (b, 0, si, 0)),
                pl.BlockSpec((1, H, Ts, d), lambda b, si: (b, 0, si, 0)),
                pl.BlockSpec((1, H, Ts, d), lambda b, si: (b, 0, si, 0)),
            ],
        ),
        compiler_params=pltpu.CompilerParams(
            dimension_semantics=("parallel", "parallel"),
            vmem_limit_bytes=(vmem_limit_bytes or _vmem_limit(proj_est)),
        ),
    )(x, wq, wk, wv)

    # ---------------- Pass 2: flash attention + output projection ----------------
    Tq = _choose_tile(S, q_tile, sub_align)
    Tkv = _choose_tile(S, kv_tile, 128)
    nq, nkv = S // Tq, S // Tkv

    # Mask plumbing (reference precedence: future overrides padding).
    if causal:
        mask_kind, mask, mask_spec, mask_tile_bytes = "causal", None, None, 0
    elif future_mask is not None:
        mask_kind = "future"
        mask = future_mask.astype(jnp.int32)                             # (S, S)
        mask_spec = pl.BlockSpec((Tq, Tkv), lambda b, qi, kv: (qi, kv))
        mask_tile_bytes = Tq * Tkv * 4
    elif src_padding_mask is not None:
        mask_kind = "padding"
        # (N, 8, S) layout (8 sublane copies) -> tiny, layout-legal, broadcast in-kernel.
        mask = jnp.broadcast_to(
            src_padding_mask.astype(jnp.int32)[:, None, :], (N, 8, S))
        mask_spec = pl.BlockSpec((1, 8, Tkv), lambda b, qi, kv: (b, 0, kv))
        mask_tile_bytes = 8 * Tkv * 4
    else:
        mask_kind, mask, mask_spec, mask_tile_bytes = "none", None, None, 0

    # Causal: clamp the K/V block index for fully-above-diagonal kv tiles so the
    # pipeline sees an unchanged block index and issues no new DMA (compute for
    # those tiles is skipped in-kernel as well).
    if causal:
        def kv_index(b, qi, kv):
            last_needed = (qi * Tq + (Tq - 1)) // Tkv
            return (b, 0, jnp.minimum(kv, last_needed), 0)
    else:
        def kv_index(b, qi, kv):
            return (b, 0, kv, 0)

    in_specs = [
        pl.BlockSpec((1, H, Tq, d), lambda b, qi, kv: (b, 0, qi, 0)),    # Q tile
        pl.BlockSpec((1, H, Tkv, d), kv_index),                          # K tile
        pl.BlockSpec((1, H, Tkv, d), kv_index),                          # V tile
        # Wo is grid-invariant (constant index_map -> fetched once). After hoisting
        # the QKV projection it is the only resident weight (E*E elements).
        pl.BlockSpec(wo.shape, lambda b, qi, kv: (0,) * wo.ndim),
    ]
    args = [q_all, k_all, v_all, wo]
    if mask is not None:
        in_specs.append(mask_spec)
        args.append(mask)

    attn_est = (2 * (H * Tq * d + 2 * H * Tkv * d) * csz   # Q/K/V tiles, double-buffered
                + 2 * wo.size * csz                        # resident Wo (x2 buffers)
                + 2 * Tq * E * xsz                         # output tile
                + 2 * mask_tile_bytes
                + (H * Tq * d + 2 * H * Tq * 128) * 4      # acc / m / l scratch (padded)
                + 3 * H * Tq * Tkv * 4)                    # f32 logits working set

    kernel = partial(_flash_attn_kernel, mask_kind=mask_kind, num_heads=H,
                     fuse_out_proj=fuse_out_proj, compute_dtype=cdt)

    return pl.pallas_call(
        kernel,
        out_shape=jax.ShapeDtypeStruct((N, S, E), x.dtype),
        grid_spec=pltpu.PrefetchScalarGridSpec(
            num_scalar_prefetch=0,
            grid=(N, nq, nkv),
            in_specs=in_specs,
            out_specs=pl.BlockSpec((1, Tq, E), lambda b, qi, kv: (b, qi, 0)),
            scratch_shapes=[
                pltpu.VMEM((H, Tq, 1), jnp.float32),   # m_s (running max)
                pltpu.VMEM((H, Tq, 1), jnp.float32),   # l_s (running denom)
                pltpu.VMEM((H, Tq, d), jnp.float32),   # acc_s
            ],
        ),
        compiler_params=pltpu.CompilerParams(
            dimension_semantics=("parallel", "parallel", "arbitrary"),
            vmem_limit_bytes=(vmem_limit_bytes or _vmem_limit(attn_est)),
        ),
    )(*args)


# ---------------------------------------------------------------------------
# Pure-JAX reference & demo.
# ---------------------------------------------------------------------------
def _reference(x, w_qkv, w_o, num_heads,
               src_padding_mask=None, future_mask=None):
    """Pure-JAX replica of the PyTorch forward (self-attention, head-concat semantics)."""
    N, S, E = x.shape
    d = E // num_heads
    qkv = x @ w_qkv.T                                    # (N, S, 3E)
    qkv = qkv.reshape(N, S, num_heads, 3 * d)
    q, k, v = jnp.split(qkv, 3, axis=-1)                 # each (N, S, H, d)
    q = jnp.transpose(q, (0, 2, 1, 3))
    k = jnp.transpose(k, (0, 2, 1, 3))
    v = jnp.transpose(v, (0, 2, 1, 3))
    logits = jnp.einsum('nhsd,nhtd->nhst', q, k) / math.sqrt(d)
    if future_mask is not None:
        logits = jnp.where(future_mask[None, None], logits, -jnp.inf)
    elif src_padding_mask is not None:
        logits = jnp.where(src_padding_mask[:, None, None, :], logits, -jnp.inf)
    attn = jax.nn.softmax(logits, axis=-1)
    vals = jnp.einsum('nhst,nhtd->nhsd', attn, v)
    vals = jnp.transpose(vals, (0, 2, 1, 3)).reshape(N, S, E)
    return vals @ w_o.T


def _xavier_uniform(key, shape):
    fan_out, fan_in = shape
    a = math.sqrt(6.0 / (fan_in + fan_out))
    return jax.random.uniform(key, shape, jnp.float32, minval=-a, maxval=a)


if __name__ == "__main__":
    N, S, E, H = 2, 8, 32, 4     # batch, seq, hidden, heads

    key = jax.random.PRNGKey(0)
    kx, kqkv, ko = jax.random.split(key, 3)

    x = jax.random.normal(kx, (N, S, E), dtype=jnp.float32)
    w_qkv = _xavier_uniform(kqkv, (3 * E, E))   # qkv_proj.weight
    w_o = _xavier_uniform(ko, (E, E))           # o_proj.weight

    future_mask = jnp.tril(jnp.ones((S, S), dtype=jnp.bool_))       # causal keep-mask
    lengths = jnp.array([S, S - 2])
    src_padding_mask = jnp.arange(S)[None, :] < lengths[:, None]    # (N, S) keep-mask

    ref_fut = _reference(x, w_qkv, w_o, H, future_mask=future_mask)
    ref_pad = _reference(x, w_qkv, w_o, H, src_padding_mask=src_padding_mask)
    ref_none = _reference(x, w_qkv, w_o, H)

    # 1) explicit future mask, f32 MXU operands
    out_fut = jax.block_until_ready(
        multi_head_attention(x, w_qkv, w_o, H, future_mask=future_mask,
                             compute_dtype=jnp.float32))
    assert out_fut.shape == (N, S, E)
    assert jnp.allclose(out_fut, ref_fut, atol=2e-3, rtol=2e-3), "future-mask mismatch"

    # 2) in-kernel causal fast path (compute-skip + DMA clamp), f32
    out_causal = jax.block_until_ready(
        multi_head_attention(x, w_qkv, w_o, H, causal=True,
                             compute_dtype=jnp.float32))
    assert jnp.allclose(out_causal, ref_fut, atol=2e-3, rtol=2e-3), "causal mismatch"

    # 3) padding mask, f32
    out_pad = jax.block_until_ready(
        multi_head_attention(x, w_qkv, w_o, H,
                             src_padding_mask=src_padding_mask,
                             compute_dtype=jnp.float32))
    assert jnp.allclose(out_pad, ref_pad, atol=2e-3, rtol=2e-3), "padding-mask mismatch"

    # 4) no mask, f32
    out_none = jax.block_until_ready(
        multi_head_attention(x, w_qkv, w_o, H, compute_dtype=jnp.float32))
    assert jnp.allclose(out_none, ref_none, atol=2e-3, rtol=2e-3), "no-mask mismatch"

    # 5) default bf16 MXU operands / f32 accumulation (recommended on v5e/v6e/v7x)
    out_bf16 = jax.block_until_ready(
        multi_head_attention(x, w_qkv, w_o, H, causal=True))
    assert jnp.allclose(out_bf16, ref_fut, atol=5e-2, rtol=5e-2), "bf16 mismatch"

    print("KERNEL_OK")
</pallas_src>

<mosaic_0001>
module attributes {stable_mosaic.version = 11 : i64} {
  func.func @_qkv_proj_kernel(%arg0: i32, %arg1: i32, %arg2: memref<1x8x32xf32, #tpu.memory_space<vmem>>, %arg3: memref<4x32x8xf32, #tpu.memory_space<vmem>>, %arg4: memref<4x32x8xf32, #tpu.memory_space<vmem>>, %arg5: memref<4x32x8xf32, #tpu.memory_space<vmem>>, %arg6: memref<1x4x8x8xf32, #tpu.memory_space<vmem>>, %arg7: memref<1x4x8x8xf32, #tpu.memory_space<vmem>>, %arg8: memref<1x4x8x8xf32, #tpu.memory_space<vmem>>) attributes {dimension_semantics = [#tpu.dimension_semantics<parallel>, #tpu.dimension_semantics<parallel>], iteration_bounds = array<i64: 2, 1>, scalar_prefetch = 0 : i64, scratch_operands = 0 : i64, tpu.core_type = #tpu.core_type<tc>, window_params = [{transform_indices = @transform_0, window_bounds = array<i64: 1, 8, 32>}, {pipeline_mode = #tpu.pipeline_mode<synchronous>, transform_indices = @transform_1, window_bounds = array<i64: 4, 32, 8>}, {pipeline_mode = #tpu.pipeline_mode<synchronous>, transform_indices = @transform_2, window_bounds = array<i64: 4, 32, 8>}, {pipeline_mode = #tpu.pipeline_mode<synchronous>, transform_indices = @transform_3, window_bounds = array<i64: 4, 32, 8>}, {transform_indices = @transform_4, window_bounds = array<i64: 1, 4, 8, 8>}, {transform_indices = @transform_5, window_bounds = array<i64: 1, 4, 8, 8>}, {transform_indices = @transform_6, window_bounds = array<i64: 1, 4, 8, 8>}]} {
    %c0 = arith.constant 0 : index
    %c0_0 = arith.constant 0 : index
    %c0_1 = arith.constant 0 : index
    %0 = vector.load %arg2[%c0, %c0_0, %c0_1] : memref<1x8x32xf32, #tpu.memory_space<vmem>>, vector<1x8x32xf32>
    %1 = vector.shape_cast %0 : vector<1x8x32xf32> to vector<8x32xf32>
    %c0_2 = arith.constant 0 : index
    %c0_3 = arith.constant 0 : index
    %c0_4 = arith.constant 0 : index
    %2 = vector.load %arg3[%c0_2, %c0_3, %c0_4] : memref<4x32x8xf32, #tpu.memory_space<vmem>>, vector<4x32x8xf32>
    "tpu.trace_start"() <{level = 10 : i32, message = "se,hed->hsd"}> : () -> ()
    %cst = arith.constant dense<0.000000e+00> : vector<4x8x8xf32>
    %3 = tpu.matmul %2, %1, %cst {dimension_numbers = #tpu.dot_dimension_numbers<[1], [1], [0, 2], [0], [0, 0, 0, 2, 1, 0], [], []>} : vector<4x32x8xf32>, vector<8x32xf32>, vector<4x8x8xf32> -> vector<4x8x8xf32>
    %4 = tpu.transpose %3, [0, 2, 1] : vector<4x8x8xf32> -> vector<4x8x8xf32>
    "tpu.trace_stop"() : () -> ()
    %c0_5 = arith.constant 0 : index
    %c0_6 = arith.constant 0 : index
    %c0_7 = arith.constant 0 : index
    %c0_8 = arith.constant 0 : index
    %5 = vector.load %arg6[%c0_5, %c0_6, %c0_7, %c0_8] : memref<1x4x8x8xf32, #tpu.memory_space<vmem>>, vector<1x4x8x8xf32>
    %6 = vector.shape_cast %5 : vector<1x4x8x8xf32> to vector<4x8x8xf32>
    %7 = vector.shape_cast %4 : vector<4x8x8xf32> to vector<1x4x8x8xf32>
    tpu.vector_store %arg6[%c0_5, %c0_6, %c0_7, %c0_8], %7 {strides = array<i32>} : memref<1x4x8x8xf32, #tpu.memory_space<vmem>>, vector<1x4x8x8xf32>,
    %c0_9 = arith.constant 0 : index
    %c0_10 = arith.constant 0 : index
    %c0_11 = arith.constant 0 : index
    %8 = vector.load %arg4[%c0_9, %c0_10, %c0_11] : memref<4x32x8xf32, #tpu.memory_space<vmem>>, vector<4x32x8xf32>
    "tpu.trace_start"() <{level = 10 : i32, message = "se,hed->hsd"}> : () -> ()
    %cst_12 = arith.constant dense<0.000000e+00> : vector<4x8x8xf32>
    %9 = tpu.matmul %8, %1, %cst_12 {dimension_numbers = #tpu.dot_dimension_numbers<[1], [1], [0, 2], [0], [0, 0, 0, 2, 1, 0], [], []>} : vector<4x32x8xf32>, vector<8x32xf32>, vector<4x8x8xf32> -> vector<4x8x8xf32>
    %10 = tpu.transpose %9, [0, 2, 1] : vector<4x8x8xf32> -> vector<4x8x8xf32>
    "tpu.trace_stop"() : () -> ()
    %c0_13 = arith.constant 0 : index
    %c0_14 = arith.constant 0 : index
    %c0_15 = arith.constant 0 : index
    %c0_16 = arith.constant 0 : index
    %11 = vector.load %arg7[%c0_13, %c0_14, %c0_15, %c0_16] : memref<1x4x8x8xf32, #tpu.memory_space<vmem>>, vector<1x4x8x8xf32>
    %12 = vector.shape_cast %11 : vector<1x4x8x8xf32> to vector<4x8x8xf32>
    %13 = vector.shape_cast %10 : vector<4x8x8xf32> to vector<1x4x8x8xf32>
    tpu.vector_store %arg7[%c0_13, %c0_14, %c0_15, %c0_16], %13 {strides = array<i32>} : memref<1x4x8x8xf32, #tpu.memory_space<vmem>>, vector<1x4x8x8xf32>,
    %c0_17 = arith.constant 0 : index
    %c0_18 = arith.constant 0 : index
    %c0_19 = arith.constant 0 : index
    %14 = vector.load %arg5[%c0_17, %c0_18, %c0_19] : memref<4x32x8xf32, #tpu.memory_space<vmem>>, vector<4x32x8xf32>
    "tpu.trace_start"() <{level = 10 : i32, message = "se,hed->hsd"}> : () -> ()
    %cst_20 = arith.constant dense<0.000000e+00> : vector<4x8x8xf32>
    %15 = tpu.matmul %14, %1, %cst_20 {dimension_numbers = #tpu.dot_dimension_numbers<[1], [1], [0, 2], [0], [0, 0, 0, 2, 1, 0], [], []>} : vector<4x32x8xf32>, vector<8x32xf32>, vector<4x8x8xf32> -> vector<4x8x8xf32>
    %16 = tpu.transpose %15, [0, 2, 1] : vector<4x8x8xf32> -> vector<4x8x8xf32>
    "tpu.trace_stop"() : () -> ()
    %c0_21 = arith.constant 0 : index
    %c0_22 = arith.constant 0 : index
    %c0_23 = arith.constant 0 : index
    %c0_24 = arith.constant 0 : index
    %17 = vector.load %arg8[%c0_21, %c0_22, %c0_23, %c0_24] : memref<1x4x8x8xf32, #tpu.memory_space<vmem>>, vector<1x4x8x8xf32>
    %18 = vector.shape_cast %17 : vector<1x4x8x8xf32> to vector<4x8x8xf32>
    %19 = vector.shape_cast %16 : vector<4x8x8xf32> to vector<1x4x8x8xf32>
    tpu.vector_store %arg8[%c0_21, %c0_22, %c0_23, %c0_24], %19 {strides = array<i32>} : memref<1x4x8x8xf32, #tpu.memory_space<vmem>>, vector<1x4x8x8xf32>,
    return
  }
  func.func @transform_0(%arg0: i32, %arg1: i32) -> (i32, i32, i32) {
    %c0_i32 = arith.constant 0 : i32
    %c0_i32_0 = arith.constant 0 : i32
    return %arg0, %arg1, %c0_i32 : i32, i32, i32
  }
  func.func @transform_1(%arg0: i32, %arg1: i32) -> (i32, i32, i32) {
    %c0_i32 = arith.constant 0 : i32
    %c0_i32_0 = arith.constant 0 : i32
    %c0_i32_1 = arith.constant 0 : i32
    %c0_i32_2 = arith.constant 0 : i32
    return %c0_i32, %c0_i32_0, %c0_i32_1 : i32, i32, i32
  }
  func.func @transform_2(%arg0: i32, %arg1: i32) -> (i32, i32, i32) {
    %c0_i32 = arith.constant 0 : i32
    %c0_i32_0 = arith.constant 0 : i32
    %c0_i32_1 = arith.constant 0 : i32
    %c0_i32_2 = arith.constant 0 : i32
    return %c0_i32, %c0_i32_0, %c0_i32_1 : i32, i32, i32
  }
  func.func @transform_3(%arg0: i32, %arg1: i32) -> (i32, i32, i32) {
    %c0_i32 = arith.constant 0 : i32
    %c0_i32_0 = arith.constant 0 : i32
    %c0_i32_1 = arith.constant 0 : i32
    %c0_i32_2 = arith.constant 0 : i32
    return %c0_i32, %c0_i32_0, %c0_i32_1 : i32, i32, i32
  }
  func.func @transform_4(%arg0: i32, %arg1: i32) -> (i32, i32, i32, i32) {
    %c0_i32 = arith.constant 0 : i32
    %c0_i32_0 = arith.constant 0 : i32
    %c0_i32_1 = arith.constant 0 : i32
    return %arg0, %c0_i32, %arg1, %c0_i32_0 : i32, i32, i32, i32
  }
  func.func @transform_5(%arg0: i32, %arg1: i32) -> (i32, i32, i32, i32) {
    %c0_i32 = arith.constant 0 : i32
    %c0_i32_0 = arith.constant 0 : i32
    %c0_i32_1 = arith.constant 0 : i32
    return %arg0, %c0_i32, %arg1, %c0_i32_0 : i32, i32, i32, i32
  }
  func.func @transform_6(%arg0: i32, %arg1: i32) -> (i32, i32, i32, i32) {
    %c0_i32 = arith.constant 0 : i32
    %c0_i32_0 = arith.constant 0 : i32
    %c0_i32_1 = arith.constant 0 : i32
    return %arg0, %c0_i32, %arg1, %c0_i32_0 : i32, i32, i32, i32
  }
}

</mosaic_0001>

<llo_original>
// kernel: tpu_custom_call.1
$region0: #{tpu_custom_call.1}
  #allocation0 [shape = 'u32[]', space=smem, size = 0x4, offset = 0x4, fixed_abs, tag = 'smem constant byte address 0x4 - core index']
  #allocation1 [shape = 'u32[144,128]{1,0:T(1,128)}', space=vmem, size = 0x12000, scoped, tag = 'internal scratch']
  %s0 = inlined_call_operand.vmem [shape: f32[2,8,32], index: 0, kind: input, shape index: {}]
  %s1 = inlined_call_operand.vmem [shape: f32[4,32,8], index: 1, kind: input, shape index: {}]
  %s2 = inlined_call_operand.vmem [shape: f32[4,32,8], index: 2, kind: input, shape index: {}]
  %s3 = inlined_call_operand.vmem [shape: f32[4,32,8], index: 3, kind: input, shape index: {}]
  %s4 = inlined_call_operand.hbm [shape: f32[2,4,8,8], index: 4, kind: output, shape index: {0}]
  %s5 = inlined_call_operand.hbm [shape: f32[2,4,8,8], index: 5, kind: output, shape index: {1}]
  %s6 = inlined_call_operand.hbm [shape: f32[2,4,8,8], index: 6, kind: output, shape index: {2}]
  %7 = xla_tuple %s4, %s5, %s6
  %s8 = sld [smem:[#allocation0]]
  $region65: #{tpu_custom_call.1} parent=0
    _
  %s10 = ssub.s32 1, %s8
  %s11 = scalar_select 0, %s10, %s8
  $region1: #{tpu_custom_call.1} parent=0
    #allocation2 [shape = 'u8[32768]{0}', space=vmem, size = 0x8000, scoped, tag = 'output window, operand 0']
    #allocation3 [shape = 's32[2]{0}', space=sflag, size = 0x8, scoped, tag = 'scoped memory for tpu_custom_call.1']
    #allocation4 [shape = 'u8[32768]{0}', space=vmem, size = 0x8000, scoped, tag = 'output window, operand 1']
    #allocation5 [shape = 's32[2]{0}', space=sflag, size = 0x8, scoped, tag = 'scoped memory for tpu_custom_call.1']
    #allocation6 [shape = 'u8[32768]{0}', space=vmem, size = 0x8000, scoped, tag = 'output window, operand 2']
    %12 = vsyncpa [#allocation3], 0
    %s13 = scalar_lea.sflag [#allocation3], 1
    %14 = vsyncpa %s13, 0
    %15 = vsyncpa [#allocation5], 0
    %s16 = scalar_lea.sflag [#allocation5], 1
    %17 = vsyncpa %s16, 0
    loop: start=0, step=1, limit=4
    $region2: #{tpu_custom_call.1} parent=1 // loop_pre_header
      _
    $region3: #{tpu_custom_call.1} parent=1 // loop_header
      %s19 = sphi 0, %s23
      %p20 = scmp.ge.s32.totalorder %s19, 4
      %s26 = sphi 0, %s38
      %s27 = sphi 0, %s34
      %s28 = sphi 0, %s26
      %s29 = sphi 0, %s27
      %s30 = sphi 0, %s28
      %s31 = sphi 0, %s29
      %s43 = sphi 0, %s45
      %s46 = sphi 0, %s43
      %s47 = sphi 0, %s46
      %s63 = sphi 0, %s47
      %s67 = sphi 0, %s67
      %s69 = sphi 0, %s67
      %s70 = sphi 0, %s69
      %s84 = sphi 0, %s70
      %s88 = sphi 0, %s88
      %s90 = sphi 0, %s88
      %s91 = sphi 0, %s90
      %s105 = sphi 0, %s91
      %s109 = sphi 0, %s109
      %s111 = sphi 0, %s109
      %s112 = sphi 0, %s111
      %s126 = sphi 0, %s112
      %s134 = sphi 0, %s136
      %s137 = sphi 0, %s134
      %s138 = sphi 0, %s137
      %s154 = sphi 0, %s138
      %s162 = sphi 0, %s164
      %s165 = sphi 0, %s162
      %s166 = sphi 0, %s165
      %s182 = sphi 0, %s166
      %s190 = sphi 0, %s192
      %s193 = sphi 0, %s190
      %s194 = sphi 0, %s193
      %s210 = sphi 0, %s194
    $region4: #{tpu_custom_call.1} parent=1 // loop_header_branch
      %22 = sbr.rel (%p20) target = $region8
    $region5: #{tpu_custom_call.1} parent=1 // loop_body
      %s24 = ssub.s32 %s19, 1
      %s25 = ssub.s32 %s19, 2
      %s32 = sadd.s32 1, %s27
      %p33 = scmp.ge.s32.totalorder %s32, 1
      %s34 = scalar_select %p33, 0, %s32
      %s35 = sadd.s32 1, %s26
      %s36 = scalar_select %p33, %s35, %s26
      %p37 = scmp.ge.s32.totalorder %s36, 2
      %s38 = scalar_select %p37, 0, %s36
      %s39 = ssub.s32 %s26, %s38
      %s40 = ssub.s32 %s27, %s34
      %s41 = sor.u32 %s39, %s40
      %p42 = scmp.eq.s32.totalorder %s41, 0
      %s44 = sadd.s32 %s43, 1
      %s45 = scalar_select %p42, %s43, %s44
      %p48 = pneg %p42
      %p49 = scmp.eq.s32.totalorder %s19, 1
      %p50 = por %p48, %p49
      %p51 = scmp.ne.s32.totalorder %s43, %s46
      %p52 = scmp.eq.s32.totalorder %s19, 0
      %p53 = por %p51, %p52
      %p54 = scmp.ne.s32.totalorder %s43, %s46
      %p55 = scmp.eq.s32.totalorder %s24, 1
      %p56 = por %p54, %p55
      %p57 = scmp.ne.s32.totalorder %s46, %s47
      %p58 = scmp.eq.s32.totalorder %s24, 0
      %p59 = por %p57, %p58
      %p60 = scmp.ne.s32.totalorder %s46, %s47
      %p61 = scmp.eq.s32.totalorder %s25, 1
      %p62 = por %p60, %p61
      %p64 = scmp.ne.s32.totalorder %s47, %s63
      %p65 = scmp.eq.s32.totalorder %s25, 0
      %p66 = por %p64, %p65
      %s68 = sadd.s32 %s67, 1
      %p71 = scmp.eq.s32.totalorder %s19, 1
      %p72 = scmp.ne.s32.totalorder %s67, %s69
      %p73 = scmp.eq.s32.totalorder %s19, 0
      %p74 = por %p72, %p73
      %p75 = scmp.ne.s32.totalorder %s67, %s69
      %p76 = scmp.eq.s32.totalorder %s24, 1
      %p77 = por %p75, %p76
      %p78 = scmp.ne.s32.totalorder %s69, %s70
      %p79 = scmp.eq.s32.totalorder %s24, 0
      %p80 = por %p78, %p79
      %p81 = scmp.ne.s32.totalorder %s69, %s70
      %p82 = scmp.eq.s32.totalorder %s25, 1
      %p83 = por %p81, %p82
      %p85 = scmp.ne.s32.totalorder %s70, %s84
      %p86 = scmp.eq.s32.totalorder %s25, 0
      %p87 = por %p85, %p86
      %s89 = sadd.s32 %s88, 1
      %p92 = scmp.eq.s32.totalorder %s19, 1
      %p93 = scmp.ne.s32.totalorder %s88, %s90
      %p94 = scmp.eq.s32.totalorder %s19, 0
      %p95 = por %p93, %p94
      %p96 = scmp.ne.s32.totalorder %s88, %s90
      %p97 = scmp.eq.s32.totalorder %s24, 1
      %p98 = por %p96, %p97
      %p99 = scmp.ne.s32.totalorder %s90, %s91
      %p100 = scmp.eq.s32.totalorder %s24, 0
      %p101 = por %p99, %p100
      %p102 = scmp.ne.s32.totalorder %s90, %s91
      %p103 = scmp.eq.s32.totalorder %s25, 1
      %p104 = por %p102, %p103
      %p106 = scmp.ne.s32.totalorder %s91, %s105
      %p107 = scmp.eq.s32.totalorder %s25, 0
      %p108 = por %p106, %p107
      %s110 = sadd.s32 %s109, 1
      %p113 = scmp.eq.s32.totalorder %s19, 1
      %p114 = scmp.ne.s32.totalorder %s109, %s111
      %p115 = scmp.eq.s32.totalorder %s19, 0
      %p116 = por %p114, %p115
      %p117 = scmp.ne.s32.totalorder %s109, %s111
      %p118 = scmp.eq.s32.totalorder %s24, 1
      %p119 = por %p117, %p118
      %p120 = scmp.ne.s32.totalorder %s111, %s112
      %p121 = scmp.eq.s32.totalorder %s24, 0
      %p122 = por %p120, %p121
      %p123 = scmp.ne.s32.totalorder %s111, %s112
      %p124 = scmp.eq.s32.totalorder %s25, 1
      %p125 = por %p123, %p124
      %p127 = scmp.ne.s32.totalorder %s112, %s126
      %p128 = scmp.eq.s32.totalorder %s25, 0
      %p129 = por %p127, %p128
      %s130 = ssub.s32 %s26, %s38
      %s131 = ssub.s32 %s27, %s34
      %s132 = sor.u32 %s130, %s131
      %p133 = scmp.eq.s32.totalorder %s132, 0
      %s135 = sadd.s32 %s134, 1
      %s136 = scalar_select %p133, %s134, %s135
      %p139 = pneg %p133
      %p140 = scmp.eq.s32.totalorder %s19, 1
      %p141 = por %p139, %p140
      %p142 = scmp.ne.s32.totalorder %s134, %s137
      %p143 = scmp.eq.s32.totalorder %s19, 0
      %p144 = por %p142, %p143
      %p145 = scmp.ne.s32.totalorder %s134, %s137
      %p146 = scmp.eq.s32.totalorder %s24, 1
      %p147 = por %p145, %p146
      %p148 = scmp.ne.s32.totalorder %s137, %s138
      %p149 = scmp.eq.s32.totalorder %s24, 0
      %p150 = por %p148, %p149
      %p151 = scmp.ne.s32.totalorder %s137, %s138
      %p152 = scmp.eq.s32.totalorder %s25, 1
      %p153 = por %p151, %p152
      %p155 = scmp.ne.s32.totalorder %s138, %s154
      %p156 = scmp.eq.s32.totalorder %s25, 0
      %p157 = por %p155, %p156
      %s158 = ssub.s32 %s26, %s38
      %s159 = ssub.s32 %s27, %s34
      %s160 = sor.u32 %s158, %s159
      %p161 = scmp.eq.s32.totalorder %s160, 0
      %s163 = sadd.s32 %s162, 1
      %s164 = scalar_select %p161, %s162, %s163
      %p167 = pneg %p161
      %p168 = scmp.eq.s32.totalorder %s19, 1
      %p169 = por %p167, %p168
      %p170 = scmp.ne.s32.totalorder %s162, %s165
      %p171 = scmp.eq.s32.totalorder %s19, 0
      %p172 = por %p170, %p171
      %p173 = scmp.ne.s32.totalorder %s162, %s165
      %p174 = scmp.eq.s32.totalorder %s24, 1
      %p175 = por %p173, %p174
      %p176 = scmp.ne.s32.totalorder %s165, %s166
      %p177 = scmp.eq.s32.totalorder %s24, 0
      %p178 = por %p176, %p177
      %p179 = scmp.ne.s32.totalorder %s165, %s166
      %p180 = scmp.eq.s32.totalorder %s25, 1
      %p181 = por %p179, %p180
      %p183 = scmp.ne.s32.totalorder %s166, %s182
      %p184 = scmp.eq.s32.totalorder %s25, 0
      %p185 = por %p183, %p184
      %s186 = ssub.s32 %s26, %s38
      %s187 = ssub.s32 %s27, %s34
      %s188 = sor.u32 %s186, %s187
      %p189 = scmp.eq.s32.totalorder %s188, 0
      %s191 = sadd.s32 %s190, 1
      %s192 = scalar_select %p189, %s190, %s191
      %p195 = pneg %p189
      %p196 = scmp.eq.s32.totalorder %s19, 1
      %p197 = por %p195, %p196
      %p198 = scmp.ne.s32.totalorder %s190, %s193
      %p199 = scmp.eq.s32.totalorder %s19, 0
      %p200 = por %p198, %p199
      %p201 = scmp.ne.s32.totalorder %s190, %s193
      %p202 = scmp.eq.s32.totalorder %s24, 1
      %p203 = por %p201, %p202
      %p204 = scmp.ne.s32.totalorder %s193, %s194
      %p205 = scmp.eq.s32.totalorder %s24, 0
      %p206 = por %p204, %p205
      %p207 = scmp.ne.s32.totalorder %s193, %s194
      %p208 = scmp.eq.s32.totalorder %s25, 1
      %p209 = por %p207, %p208
      %p211 = scmp.ne.s32.totalorder %s194, %s210
      %p212 = scmp.eq.s32.totalorder %s25, 0
      %p213 = por %p211, %p212
      %p214 = scmp.le.s32.totalorder 1, %s19
      %p215 = scmp.lt.s32.totalorder %s19, 3
      %p216 = pnand %p214, %p215
      %p217 = pneg %p216
      // Predicated region
      $region9: #{tpu_custom_call.1} parent=5 // pred_check
        _
      $region10: #{tpu_custom_call.1} parent=5 // pred_check_branch
        %219 = sbr.rel (%p216) target = $region12
      $region11: #{tpu_custom_call.1} parent=5 // pred_region
        %s220 = ssub.s32 %s19, 1
        // Predicated region
        $region13: #{tpu_custom_call.1} parent=11 // pred_check
          %p221 = pneg %p80
        $region14: #{tpu_custom_call.1} parent=11 // pred_check_branch
          %223 = sbr.rel (%p221) target = $region16
        $region15: #{tpu_custom_call.1} parent=11 // pred_region
          _
        $region16: #{tpu_custom_call.1} parent=11 // pred_fallthru
          _
        // Predicated region
        $region17: #{tpu_custom_call.1} parent=11 // pred_check
          %p224 = pneg %p101
        $region18: #{tpu_custom_call.1} parent=11 // pred_check_branch
          %226 = sbr.rel (%p224) target = $region20
        $region19: #{tpu_custom_call.1} parent=11 // pred_region
          _
        $region20: #{tpu_custom_call.1} parent=11 // pred_fallthru
          _
        // Predicated region
        $region21: #{tpu_custom_call.1} parent=11 // pred_check
          %p227 = pneg %p122
        $region22: #{tpu_custom_call.1} parent=11 // pred_check_branch
          %229 = sbr.rel (%p227) target = $region24
        $region23: #{tpu_custom_call.1} parent=11 // pred_region
          _
        $region24: #{tpu_custom_call.1} parent=11 // pred_fallthru
          _
      $region12: #{tpu_custom_call.1} parent=5 // pred_fallthru
        _
      %p230 = scmp.lt.s32.totalorder %s19, 2
      // Predicated region
      $region25: #{tpu_custom_call.1} parent=5 // pred_check
        %p231 = pneg %p230
      $region26: #{tpu_custom_call.1} parent=5 // pred_check_branch
        %233 = sbr.rel (%p231) target = $region28
      $region27: #{tpu_custom_call.1} parent=5 // pred_region
        // Predicated region
        $region29: #{tpu_custom_call.1} parent=27 // pred_check
          %p234 = pneg %p53
        $region30: #{tpu_custom_call.1} parent=27 // pred_check_branch
          %236 = sbr.rel (%p234) target = $region32
        $region31: #{tpu_custom_call.1} parent=27 // pred_region
          %p237 = scmp.lt.s32.totalorder %s26, 1
          %s238 = scalar_select %p237, %s26, 1
          %p239 = scmp.lt.s32.totalorder %s27, 0
          %s240 = scalar_select %p239, %s27, 0
          %s241 = sadd.s32 %s240, %s238
          %s242 = smul.addr %s241, 8
          %s243 = scalar_lea.vmem %s0, %s242
        $region32: #{tpu_custom_call.1} parent=27 // pred_fallthru
          _
      $region28: #{tpu_custom_call.1} parent=5 // pred_fallthru
        _
      %p244 = scmp.le.s32.totalorder 1, %s19
      %p245 = scmp.lt.s32.totalorder %s19, 3
      %p246 = pnand %p244, %p245
      %p247 = pneg %p246
      // Predicated region
      $region33: #{tpu_custom_call.1} parent=5 // pred_check
        _
      $region34: #{tpu_custom_call.1} parent=5 // pred_check_branch
        %249 = sbr.rel (%p246) target = $region36
      $region35: #{tpu_custom_call.1} parent=5 // pred_region
        %s250 = ssub.s32 %s19, 1
        %p251 = scmp.lt.s32.totalorder %s28, 1
        %s252 = scalar_select %p251, %s28, 1
        %p253 = scmp.lt.s32.totalorder %s29, 0
        %s254 = scalar_select %p253, %s29, 0
        %s255 = sadd.s32 %s254, %s252
        %s256 = smul.addr %s255, 8
        %s257 = scalar_lea.vmem %s0, %s256
        %p258 = pneg %p59
        %p259 = pneg %p56
        %p260 = pneg %p80
        %p261 = pneg %p77
        %p262 = pneg %p101
        %p263 = pneg %p98
        %p264 = pneg %p122
        %p265 = pneg %p119
        %p266 = pneg %p150
        %p267 = pneg %p147
        %s268 = sand.u32 %s137, 1
        %s269 = scalar_lea.sflag [#allocation3], %s268
        %s270 = sand.u32 %s137, 1
        %s271 = smul.addr %s270, 32
        %s272 = scalar_lea.vmem [#allocation2], %s271
        %p273 = pneg %p178
        %p274 = pneg %p175
        %s275 = sand.u32 %s24, 1
        %s276 = scalar_lea.sflag [#allocation5], %s275
        %s277 = sand.u32 %s165, 1
        %s278 = smul.addr %s277, 32
        %s279 = scalar_lea.vmem [#allocation4], %s278
        %p280 = pneg %p206
        %p281 = pneg %p203
        %s282 = sand.u32 %s24, 1
        %s283 = scalar_lea.sflag [#allocation5], %s282
        %s284 = sand.u32 %s193, 1
        %s285 = smul.addr %s284, 32
        %s286 = scalar_lea.vmem [#allocation6], %s285
        %p287 = scmp.lt.s32.totalorder %s28, 1
        %s288 = scalar_select %p287, %s28, 1
        %p289 = scmp.lt.s32.totalorder %s29, 0
        %s290 = scalar_select %p289, %s29, 0
        %s291 = sadd.s32 %s290, %s288
        %s292 = smul.addr %s291, 8
        %s293 = scalar_lea.vmem %s0, %s292
        %v294 = vld [vmem:[%s293] sm:$0xff]
        %v295 = vld [vmem:[%s1] sm:$0xff]
        %v296 = vld [vmem:[%s1 + $0x8] sm:$0xff]
        %v297 = vld [vmem:[%s1 + $0x10] sm:$0xff]
        %v298 = vld [vmem:[%s1 + $0x18] sm:$0xff]
        %v299 = vld [vmem:[%s1 + $0x20] sm:$0xff]
        %v300 = vld [vmem:[%s1 + $0x28] sm:$0xff]
        %v301 = vld [vmem:[%s1 + $0x30] sm:$0xff]
        %v302 = vld [vmem:[%s1 + $0x38] sm:$0xff]
        %v303 = vld [vmem:[%s1 + $0x40] sm:$0xff]
        %v304 = vld [vmem:[%s1 + $0x48] sm:$0xff]
        %v305 = vld [vmem:[%s1 + $0x50] sm:$0xff]
        %v306 = vld [vmem:[%s1 + $0x58] sm:$0xff]
        %v307 = vld [vmem:[%s1 + $0x60] sm:$0xff]
        %v308 = vld [vmem:[%s1 + $0x68] sm:$0xff]
        %v309 = vld [vmem:[%s1 + $0x70] sm:$0xff]
        %v310 = vld [vmem:[%s1 + $0x78] sm:$0xff]
        %311 = vxpose.xlu0.b32.start [1/16] %v295, 128
        %312 = vxpose.xlu0.b32.cont [2/16] %v296, 128
        %313 = vxpose.xlu0.b32.cont [3/16] %v297, 128
        %314 = vxpose.xlu0.b32.cont [4/16] %v298, 128
        %315 = vxpose.xlu0.b32.cont [5/16] 0.0, 128
        %316 = vxpose.xlu0.b32.cont [6/16] 0.0, 128
        %317 = vxpose.xlu0.b32.cont [7/16] 0.0, 128
        %318 = vxpose.xlu0.b32.cont [8/16] 0.0, 128
        %319 = vxpose.xlu0.b32.cont [9/16] 0.0, 128
        %320 = vxpose.xlu0.b32.cont [10/16] 0.0, 128
        %321 = vxpose.xlu0.b32.cont [11/16] 0.0, 128
        %322 = vxpose.xlu0.b32.cont [12/16] 0.0, 128
        %323 = vxpose.xlu0.b32.cont [13/16] 0.0, 128
        %324 = vxpose.xlu0.b32.cont [14/16] 0.0, 128
        %325 = vxpose.xlu0.b32.cont [15/16] 0.0, 128
        %326 = vxpose.xlu0.b32.end [16/16] 0.0, 128
        %v327 = vpop.trf.xlu0
        %v328 = vpop.trf.xlu0
        %v329 = vpop.trf.xlu0
        %v330 = vpop.trf.xlu0
        %v331 = vpop.trf.xlu0
        %v332 = vpop.trf.xlu0
        %v333 = vpop.trf.xlu0
        %v334 = vpop.trf.xlu0
        %v335 = vpop.trf.xlu0
        %v336 = vpop.trf.xlu0
        %v337 = vpop.trf.xlu0
        %v338 = vpop.trf.xlu0
        %v339 = vpop.trf.xlu0
        %v340 = vpop.trf.xlu0
        %v341 = vpop.trf.xlu0
        %v342 = vpop.trf.xlu0
        %343 = vxpose.xlu0.b32.start [1/16] %v299, 128
        %344 = vxpose.xlu0.b32.cont [2/16] %v300, 128
        %345 = vxpose.xlu0.b32.cont [3/16] %v301, 128
        %346 = vxpose.xlu0.b32.cont [4/16] %v302, 128
        %347 = vxpose.xlu0.b32.cont [5/16] 0.0, 128
        %348 = vxpose.xlu0.b32.cont [6/16] 0.0, 128
        %349 = vxpose.xlu0.b32.cont [7/16] 0.0, 128
        %350 = vxpose.xlu0.b32.cont [8/16] 0.0, 128
        %351 = vxpose.xlu0.b32.cont [9/16] 0.0, 128
        %352 = vxpose.xlu0.b32.cont [10/16] 0.0, 128
        %353 = vxpose.xlu0.b32.cont [11/16] 0.0, 128
        %354 = vxpose.xlu0.b32.cont [12/16] 0.0, 128
        %355 = vxpose.xlu0.b32.cont [13/16] 0.0, 128
        %356 = vxpose.xlu0.b32.cont [14/16] 0.0, 128
        %357 = vxpose.xlu0.b32.cont [15/16] 0.0, 128
        %358 = vxpose.xlu0.b32.end [16/16] 0.0, 128
        %v359 = vpop.trf.xlu0
        %v360 = vpop.trf.xlu0
        %v361 = vpop.trf.xlu0
        %v362 = vpop.trf.xlu0
        %v363 = vpop.trf.xlu0
        %v364 = vpop.trf.xlu0
        %v365 = vpop.trf.xlu0
        %v366 = vpop.trf.xlu0
        %v367 = vpop.trf.xlu0
        %v368 = vpop.trf.xlu0
        %v369 = vpop.trf.xlu0
        %v370 = vpop.trf.xlu0
        %v371 = vpop.trf.xlu0
        %v372 = vpop.trf.xlu0
        %v373 = vpop.trf.xlu0
        %v374 = vpop.trf.xlu0
        %375 = vxpose.xlu0.b32.start [1/16] %v303, 128
        %376 = vxpose.xlu0.b32.cont [2/16] %v304, 128
        %377 = vxpose.xlu0.b32.cont [3/16] %v305, 128
        %378 = vxpose.xlu0.b32.cont [4/16] %v306, 128
        %379 = vxpose.xlu0.b32.cont [5/16] 0.0, 128
        %380 = vxpose.xlu0.b32.cont [6/16] 0.0, 128
        %381 = vxpose.xlu0.b32.cont [7/16] 0.0, 128
        %382 = vxpose.xlu0.b32.cont [8/16] 0.0, 128
        %383 = vxpose.xlu0.b32.cont [9/16] 0.0, 128
        %384 = vxpose.xlu0.b32.cont [10/16] 0.0, 128
        %385 = vxpose.xlu0.b32.cont [11/16] 0.0, 128
        %386 = vxpose.xlu0.b32.cont [12/16] 0.0, 128
        %387 = vxpose.xlu0.b32.cont [13/16] 0.0, 128
        %388 = vxpose.xlu0.b32.cont [14/16] 0.0, 128
        %389 = vxpose.xlu0.b32.cont [15/16] 0.0, 128
        %390 = vxpose.xlu0.b32.end [16/16] 0.0, 128
        %v391 = vpop.trf.xlu0
        %v392 = vpop.trf.xlu0
        %v393 = vpop.trf.xlu0
        %v394 = vpop.trf.xlu0
        %v395 = vpop.trf.xlu0
        %v396 = vpop.trf.xlu0
        %v397 = vpop.trf.xlu0
        %v398 = vpop.trf.xlu0
        %v399 = vpop.trf.xlu0
        %v400 = vpop.trf.xlu0
        %v401 = vpop.trf.xlu0
        %v402 = vpop.trf.xlu0
        %v403 = vpop.trf.xlu0
        %v404 = vpop.trf.xlu0
        %v405 = vpop.trf.xlu0
        %v406 = vpop.trf.xlu0
        %407 = vxpose.xlu0.b32.start [1/16] %v307, 128
        %408 = vxpose.xlu0.b32.cont [2/16] %v308, 128
        %409 = vxpose.xlu0.b32.cont [3/16] %v309, 128
        %410 = vxpose.xlu0.b32.cont [4/16] %v310, 128
        %411 = vxpose.xlu0.b32.cont [5/16] 0.0, 128
        %412 = vxpose.xlu0.b32.cont [6/16] 0.0, 128
        %413 = vxpose.xlu0.b32.cont [7/16] 0.0, 128
        %414 = vxpose.xlu0.b32.cont [8/16] 0.0, 128
        %415 = vxpose.xlu0.b32.cont [9/16] 0.0, 128
        %416 = vxpose.xlu0.b32.cont [10/16] 0.0, 128
        %417 = vxpose.xlu0.b32.cont [11/16] 0.0, 128
        %418 = vxpose.xlu0.b32.cont [12/16] 0.0, 128
        %419 = vxpose.xlu0.b32.cont [13/16] 0.0, 128
        %420 = vxpose.xlu0.b32.cont [14/16] 0.0, 128
        %421 = vxpose.xlu0.b32.cont [15/16] 0.0, 128
        %422 = vxpose.xlu0.b32.end [16/16] 0.0, 128
        %v423 = vpop.trf.xlu0
        %v424 = vpop.trf.xlu0
        %v425 = vpop.trf.xlu0
        %v426 = vpop.trf.xlu0
        %v427 = vpop.trf.xlu0
        %v428 = vpop.trf.xlu0
        %v429 = vpop.trf.xlu0
        %v430 = vpop.trf.xlu0
        %v431 = vpop.trf.xlu0
        %v432 = vpop.trf.xlu0
        %v433 = vpop.trf.xlu0
        %v434 = vpop.trf.xlu0
        %v435 = vpop.trf.xlu0
        %v436 = vpop.trf.xlu0
        %v437 = vpop.trf.xlu0
        %v438 = vpop.trf.xlu0
        %vm439 = vcmask 261120
        %v441 = vsel %vm439, %v327, 0
        %v444 = vsel %vm439, %v359, 0
        %v447 = vsel %vm439, %v391, 0
        %v450 = vsel %vm439, %v423, 0
        %v453 = vsel %vm439, %v294, 0
        %455 = vmatprep.subr.mxu0 0.0
        %456 = vmatpush1.xpose.msra.mxu0 0.0
        %457 = vmatprep.subr.mxu0 0.0
        %458 = vmatpush1.xpose.msra.mxu0 0.0
        %459 = vmatprep.subr.mxu0 0.0
        %460 = vmatpush1.xpose.msra.mxu0 0.0
        %461 = vmatprep.subr.mxu0 0.0
        %462 = vmatpush1.xpose.msra.mxu0 0.0
        %463 = vmatprep.subr.mxu0 0.0
        %464 = vmatpush1.xpose.msra.mxu0 0.0
        %465 = vmatprep.subr.mxu0 0.0
        %466 = vmatpush1.xpose.msra.mxu0 0.0
        %467 = vmatprep.subr.mxu0 0.0
        %468 = vmatpush1.xpose.msra.mxu0 0.0
        %469 = vmatprep.subr.mxu0 0.0
        %470 = vmatpush1.xpose.msra.mxu0 0.0
        %471 = vmatprep.subr.mxu0 0.0
        %472 = vmatpush1.xpose.msra.mxu0 0.0
        %473 = vmatprep.subr.mxu0 0.0
        %474 = vmatpush1.xpose.msra.mxu0 0.0
        %475 = vmatprep.subr.mxu0 0.0
        %476 = vmatpush1.xpose.msra.mxu0 0.0
        %477 = vmatprep.subr.mxu0 0.0
        %478 = vmatpush1.xpose.msra.mxu0 0.0
        %479 = vmatprep.subr.mxu0 0.0
        %480 = vmatpush1.xpose.msra.mxu0 0.0
        %481 = vmatprep.subr.mxu0 0.0
        %482 = vmatpush1.xpose.msra.mxu0 0.0
        %483 = vmatprep.subr.mxu0 0.0
        %484 = vmatpush1.xpose.msra.mxu0 0.0
        %485 = vmatprep.subr.mxu0 0.0
        %486 = vmatpush1.xpose.msra.mxu0 %v453
        %487 = vmatprep.subr.mxu0 0.0
        %488 = vmatpush2.xpose.msra.mxu0 0.0
        %489 = vmatprep.subr.mxu0 0.0
        %490 = vmatpush2.xpose.msra.mxu0 0.0
        %491 = vmatprep.subr.mxu0 0.0
        %492 = vmatpush2.xpose.msra.mxu0 0.0
        %493 = vmatprep.subr.mxu0 0.0
        %494 = vmatpush2.xpose.msra.mxu0 0.0
        %495 = vmatprep.subr.mxu0 0.0
        %496 = vmatpush2.xpose.msra.mxu0 0.0
        %497 = vmatprep.subr.mxu0 0.0
        %498 = vmatpush2.xpose.msra.mxu0 0.0
        %499 = vmatprep.subr.mxu0 0.0
        %500 = vmatpush2.xpose.msra.mxu0 0.0
        %501 = vmatprep.subr.mxu0 0.0
        %502 = vmatpush2.xpose.msra.mxu0 0.0
        %503 = vmatprep.subr.mxu0 0.0
        %504 = vmatpush2.xpose.msra.mxu0 0.0
        %505 = vmatprep.subr.mxu0 0.0
        %506 = vmatpush2.xpose.msra.mxu0 0.0
        %507 = vmatprep.subr.mxu0 0.0
        %508 = vmatpush2.xpose.msra.mxu0 0.0
        %509 = vmatprep.subr.mxu0 0.0
        %510 = vmatpush2.xpose.msra.mxu0 0.0
        %511 = vmatprep.subr.mxu0 0.0
        %512 = vmatpush2.xpose.msra.mxu0 0.0
        %513 = vmatprep.subr.mxu0 0.0
        %514 = vmatpush2.xpose.msra.mxu0 0.0
        %515 = vmatprep.subr.mxu0 0.0
        %516 = vmatpush2.xpose.msra.mxu0 0.0
        %517 = vmatprep.subr.mxu0 0.0
        %518 = vmatpush2.xpose.msra.mxu0 0.0
        %519 = vmatprep.mubr.f32.mxu0 0.0
        %520 = vmatmul.mubr.f32.gmra.mxu0 %v441
        %v521 = vpop.f32.mrf.mxu0
        %v522 = vadd.f32 0.0, %v521
        %v523 = vpop.f32.mrf.mxu0
        %524 = vmatprep.mubr.f32.mxu0 0.0
        %525 = vmatmul.mubr.f32.gmra.mxu0 %v444
        %v526 = vpop.f32.mrf.mxu0
        %v527 = vadd.f32 0.0, %v526
        %v528 = vpop.f32.mrf.mxu0
        %529 = vmatprep.mubr.f32.mxu0 0.0
        %530 = vmatmul.mubr.f32.gmra.mxu0 %v447
        %v531 = vpop.f32.mrf.mxu0
        %v532 = vadd.f32 0.0, %v531
        %v533 = vpop.f32.mrf.mxu0
        %534 = vmatprep.mubr.f32.mxu0 0.0
        %535 = vmatmul.mubr.f32.gmra.mxu0 %v450
        %v536 = vpop.f32.mrf.mxu0
        %v537 = vadd.f32 0.0, %v536
        %v538 = vpop.f32.mrf.mxu0
        %539 = vdwg.mxu0
        %540 = vxpose.xlu0.b32.start [1/16] %v522, 128
        %541 = vxpose.xlu0.b32.cont [2/16] 0.0, 128
        %542 = vxpose.xlu0.b32.cont [3/16] 0.0, 128
        %543 = vxpose.xlu0.b32.cont [4/16] 0.0, 128
        %544 = vxpose.xlu0.b32.cont [5/16] 0.0, 128
        %545 = vxpose.xlu0.b32.cont [6/16] 0.0, 128
        %546 = vxpose.xlu0.b32.cont [7/16] 0.0, 128
        %547 = vxpose.xlu0.b32.cont [8/16] 0.0, 128
        %548 = vxpose.xlu0.b32.cont [9/16] 0.0, 128
        %549 = vxpose.xlu0.b32.cont [10/16] 0.0, 128
        %550 = vxpose.xlu0.b32.cont [11/16] 0.0, 128
        %551 = vxpose.xlu0.b32.cont [12/16] 0.0, 128
        %552 = vxpose.xlu0.b32.cont [13/16] 0.0, 128
        %553 = vxpose.xlu0.b32.cont [14/16] 0.0, 128
        %554 = vxpose.xlu0.b32.cont [15/16] 0.0, 128
        %555 = vxpose.xlu0.b32.end [16/16] 0.0, 128
        %v556 = vpop.trf.xlu0
        %v557 = vpop.trf.xlu0
        %v558 = vpop.trf.xlu0
        %v559 = vpop.trf.xlu0
        %v560 = vpop.trf.xlu0
        %v561 = vpop.trf.xlu0
        %v562 = vpop.trf.xlu0
        %v563 = vpop.trf.xlu0
        %v564 = vpop.trf.xlu0
        %v565 = vpop.trf.xlu0
        %v566 = vpop.trf.xlu0
        %v567 = vpop.trf.xlu0
        %v568 = vpop.trf.xlu0
        %v569 = vpop.trf.xlu0
        %v570 = vpop.trf.xlu0
        %v571 = vpop.trf.xlu0
        %572 = vxpose.xlu0.b32.start [1/16] %v527, 128
        %573 = vxpose.xlu0.b32.cont [2/16] 0.0, 128
        %574 = vxpose.xlu0.b32.cont [3/16] 0.0, 128
        %575 = vxpose.xlu0.b32.cont [4/16] 0.0, 128
        %576 = vxpose.xlu0.b32.cont [5/16] 0.0, 128
        %577 = vxpose.xlu0.b32.cont [6/16] 0.0, 128
        %578 = vxpose.xlu0.b32.cont [7/16] 0.0, 128
        %579 = vxpose.xlu0.b32.cont [8/16] 0.0, 128
        %580 = vxpose.xlu0.b32.cont [9/16] 0.0, 128
        %581 = vxpose.xlu0.b32.cont [10/16] 0.0, 128
        %582 = vxpose.xlu0.b32.cont [11/16] 0.0, 128
        %583 = vxpose.xlu0.b32.cont [12/16] 0.0, 128
        %584 = vxpose.xlu0.b32.cont [13/16] 0.0, 128
        %585 = vxpose.xlu0.b32.cont [14/16] 0.0, 128
        %586 = vxpose.xlu0.b32.cont [15/16] 0.0, 128
        %587 = vxpose.xlu0.b32.end [16/16] 0.0, 128
        %v588 = vpop.trf.xlu0
        %v589 = vpop.trf.xlu0
        %v590 = vpop.trf.xlu0
        %v591 = vpop.trf.xlu0
        %v592 = vpop.trf.xlu0
        %v593 = vpop.trf.xlu0
        %v594 = vpop.trf.xlu0
        %v595 = vpop.trf.xlu0
        %v596 = vpop.trf.xlu0
        %v597 = vpop.trf.xlu0
        %v598 = vpop.trf.xlu0
        %v599 = vpop.trf.xlu0
        %v600 = vpop.trf.xlu0
        %v601 = vpop.trf.xlu0
        %v602 = vpop.trf.xlu0
        %v603 = vpop.trf.xlu0
        %604 = vxpose.xlu0.b32.start [1/16] %v532, 128
        %605 = vxpose.xlu0.b32.cont [2/16] 0.0, 128
        %606 = vxpose.xlu0.b32.cont [3/16] 0.0, 128
        %607 = vxpose.xlu0.b32.cont [4/16] 0.0, 128
        %608 = vxpose.xlu0.b32.cont [5/16] 0.0, 128
        %609 = vxpose.xlu0.b32.cont [6/16] 0.0, 128
        %610 = vxpose.xlu0.b32.cont [7/16] 0.0, 128
        %611 = vxpose.xlu0.b32.cont [8/16] 0.0, 128
        %612 = vxpose.xlu0.b32.cont [9/16] 0.0, 128
        %613 = vxpose.xlu0.b32.cont [10/16] 0.0, 128
        %614 = vxpose.xlu0.b32.cont [11/16] 0.0, 128
        %615 = vxpose.xlu0.b32.cont [12/16] 0.0, 128
        %616 = vxpose.xlu0.b32.cont [13/16] 0.0, 128
        %617 = vxpose.xlu0.b32.cont [14/16] 0.0, 128
        %618 = vxpose.xlu0.b32.cont [15/16] 0.0, 128
        %619 = vxpose.xlu0.b32.end [16/16] 0.0, 128
        %v620 = vpop.trf.xlu0
        %v621 = vpop.trf.xlu0
        %v622 = vpop.trf.xlu0
        %v623 = vpop.trf.xlu0
        %v624 = vpop.trf.xlu0
        %v625 = vpop.trf.xlu0
        %v626 = vpop.trf.xlu0
        %v627 = vpop.trf.xlu0
        %v628 = vpop.trf.xlu0
        %v629 = vpop.trf.xlu0
        %v630 = vpop.trf.xlu0
        %v631 = vpop.trf.xlu0
        %v632 = vpop.trf.xlu0
        %v633 = vpop.trf.xlu0
        %v634 = vpop.trf.xlu0
        %v635 = vpop.trf.xlu0
        %636 = vxpose.xlu0.b32.start [1/16] %v537, 128
        %637 = vxpose.xlu0.b32.cont [2/16] 0.0, 128
        %638 = vxpose.xlu0.b32.cont [3/16] 0.0, 128
        %639 = vxpose.xlu0.b32.cont [4/16] 0.0, 128
        %640 = vxpose.xlu0.b32.cont [5/16] 0.0, 128
        %641 = vxpose.xlu0.b32.cont [6/16] 0.0, 128
        %642 = vxpose.xlu0.b32.cont [7/16] 0.0, 128
        %643 = vxpose.xlu0.b32.cont [8/16] 0.0, 128
        %644 = vxpose.xlu0.b32.cont [9/16] 0.0, 128
        %645 = vxpose.xlu0.b32.cont [10/16] 0.0, 128
        %646 = vxpose.xlu0.b32.cont [11/16] 0.0, 128
        %647 = vxpose.xlu0.b32.cont [12/16] 0.0, 128
        %648 = vxpose.xlu0.b32.cont [13/16] 0.0, 128
        %649 = vxpose.xlu0.b32.cont [14/16] 0.0, 128
        %650 = vxpose.xlu0.b32.cont [15/16] 0.0, 128
        %651 = vxpose.xlu0.b32.end [16/16] 0.0, 128
        %v652 = vpop.trf.xlu0
        %v653 = vpop.trf.xlu0
        %v654 = vpop.trf.xlu0
        %v655 = vpop.trf.xlu0
        %v656 = vpop.trf.xlu0
        %v657 = vpop.trf.xlu0
        %v658 = vpop.trf.xlu0
        %v659 = vpop.trf.xlu0
        %v660 = vpop.trf.xlu0
        %v661 = vpop.trf.xlu0
        %v662 = vpop.trf.xlu0
        %v663 = vpop.trf.xlu0
        %v664 = vpop.trf.xlu0
        %v665 = vpop.trf.xlu0
        %v666 = vpop.trf.xlu0
        %v667 = vpop.trf.xlu0
        %vm668 = vcmask 64512
        %669 = vst.msk [vmem:[%s272] sm:$0xff] %vm668, %v556
        %670 = vst.msk [vmem:[%s272 + $0x8] sm:$0xff] %vm668, %v588
        %671 = vst.msk [vmem:[%s272 + $0x10] sm:$0xff] %vm668, %v620
        %672 = vst.msk [vmem:[%s272 + $0x18] sm:$0xff] %vm668, %v652
        %v673 = vld [vmem:[%s2] sm:$0xff]
        %v674 = vld [vmem:[%s2 + $0x8] sm:$0xff]
        %v675 = vld [vmem:[%s2 + $0x10] sm:$0xff]
        %v676 = vld [vmem:[%s2 + $0x18] sm:$0xff]
        %v677 = vld [vmem:[%s2 + $0x20] sm:$0xff]
        %v678 = vld [vmem:[%s2 + $0x28] sm:$0xff]
        %v679 = vld [vmem:[%s2 + $0x30] sm:$0xff]
        %v680 = vld [vmem:[%s2 + $0x38] sm:$0xff]
        %v681 = vld [vmem:[%s2 + $0x40] sm:$0xff]
        %v682 = vld [vmem:[%s2 + $0x48] sm:$0xff]
        %v683 = vld [vmem:[%s2 + $0x50] sm:$0xff]
        %v684 = vld [vmem:[%s2 + $0x58] sm:$0xff]
        %v685 = vld [vmem:[%s2 + $0x60] sm:$0xff]
        %v686 = vld [vmem:[%s2 + $0x68] sm:$0xff]
        %v687 = vld [vmem:[%s2 + $0x70] sm:$0xff]
        %v688 = vld [vmem:[%s2 + $0x78] sm:$0xff]
        %689 = vxpose.xlu0.b32.start [1/16] %v673, 128
        %690 = vxpose.xlu0.b32.cont [2/16] %v674, 128
        %691 = vxpose.xlu0.b32.cont [3/16] %v675, 128
        %692 = vxpose.xlu0.b32.cont [4/16] %v676, 128
        %693 = vxpose.xlu0.b32.cont [5/16] 0.0, 128
        %694 = vxpose.xlu0.b32.cont [6/16] 0.0, 128
        %695 = vxpose.xlu0.b32.cont [7/16] 0.0, 128
        %696 = vxpose.xlu0.b32.cont [8/16] 0.0, 128
        %697 = vxpose.xlu0.b32.cont [9/16] 0.0, 128
        %698 = vxpose.xlu0.b32.cont [10/16] 0.0, 128
        %699 = vxpose.xlu0.b32.cont [11/16] 0.0, 128
        %700 = vxpose.xlu0.b32.cont [12/16] 0.0, 128
        %701 = vxpose.xlu0.b32.cont [13/16] 0.0, 128
        %702 = vxpose.xlu0.b32.cont [14/16] 0.0, 128
        %703 = vxpose.xlu0.b32.cont [15/16] 0.0, 128
        %704 = vxpose.xlu0.b32.end [16/16] 0.0, 128
        %v705 = vpop.trf.xlu0
        %v706 = vpop.trf.xlu0
        %v707 = vpop.trf.xlu0
        %v708 = vpop.trf.xlu0
        %v709 = vpop.trf.xlu0
        %v710 = vpop.trf.xlu0
        %v711 = vpop.trf.xlu0
        %v712 = vpop.trf.xlu0
        %v713 = vpop.trf.xlu0
        %v714 = vpop.trf.xlu0
        %v715 = vpop.trf.xlu0
        %v716 = vpop.trf.xlu0
        %v717 = vpop.trf.xlu0
        %v718 = vpop.trf.xlu0
        %v719 = vpop.trf.xlu0
        %v720 = vpop.trf.xlu0
        %721 = vxpose.xlu0.b32.start [1/16] %v677, 128
        %722 = vxpose.xlu0.b32.cont [2/16] %v678, 128
        %723 = vxpose.xlu0.b32.cont [3/16] %v679, 128
        %724 = vxpose.xlu0.b32.cont [4/16] %v680, 128
        %725 = vxpose.xlu0.b32.cont [5/16] 0.0, 128
        %726 = vxpose.xlu0.b32.cont [6/16] 0.0, 128
        %727 = vxpose.xlu0.b32.cont [7/16] 0.0, 128
        %728 = vxpose.xlu0.b32.cont [8/16] 0.0, 128
        %729 = vxpose.xlu0.b32.cont [9/16] 0.0, 128
        %730 = vxpose.xlu0.b32.cont [10/16] 0.0, 128
        %731 = vxpose.xlu0.b32.cont [11/16] 0.0, 128
        %732 = vxpose.xlu0.b32.cont [12/16] 0.0, 128
        %733 = vxpose.xlu0.b32.cont [13/16] 0.0, 128
        %734 = vxpose.xlu0.b32.cont [14/16] 0.0, 128
        %735 = vxpose.xlu0.b32.cont [15/16] 0.0, 128
        %736 = vxpose.xlu0.b32.end [16/16] 0.0, 128
        %v737 = vpop.trf.xlu0
        %v738 = vpop.trf.xlu0
        %v739 = vpop.trf.xlu0
        %v740 = vpop.trf.xlu0
        %v741 = vpop.trf.xlu0
        %v742 = vpop.trf.xlu0
        %v743 = vpop.trf.xlu0
        %v744 = vpop.trf.xlu0
        %v745 = vpop.trf.xlu0
        %v746 = vpop.trf.xlu0
        %v747 = vpop.trf.xlu0
        %v748 = vpop.trf.xlu0
        %v749 = vpop.trf.xlu0
        %v750 = vpop.trf.xlu0
        %v751 = vpop.trf.xlu0
        %v752 = vpop.trf.xlu0
        %753 = vxpose.xlu0.b32.start [1/16] %v681, 128
        %754 = vxpose.xlu0.b32.cont [2/16] %v682, 128
        %755 = vxpose.xlu0.b32.cont [3/16] %v683, 128
        %756 = vxpose.xlu0.b32.cont [4/16] %v684, 128
        %757 = vxpose.xlu0.b32.cont [5/16] 0.0, 128
        %758 = vxpose.xlu0.b32.cont [6/16] 0.0, 128
        %759 = vxpose.xlu0.b32.cont [7/16] 0.0, 128
        %760 = vxpose.xlu0.b32.cont [8/16] 0.0, 128
        %761 = vxpose.xlu0.b32.cont [9/16] 0.0, 128
        %762 = vxpose.xlu0.b32.cont [10/16] 0.0, 128
        %763 = vxpose.xlu0.b32.cont [11/16] 0.0, 128
        %764 = vxpose.xlu0.b32.cont [12/16] 0.0, 128
        %765 = vxpose.xlu0.b32.cont [13/16] 0.0, 128
        %766 = vxpose.xlu0.b32.cont [14/16] 0.0, 128
        %767 = vxpose.xlu0.b32.cont [15/16] 0.0, 128
        %768 = vxpose.xlu0.b32.end [16/16] 0.0, 128
        %v769 = vpop.trf.xlu0
        %v770 = vpop.trf.xlu0
        %v771 = vpop.trf.xlu0
        %v772 = vpop.trf.xlu0
        %v773 = vpop.trf.xlu0
        %v774 = vpop.trf.xlu0
        %v775 = vpop.trf.xlu0
        %v776 = vpop.trf.xlu0
        %v777 = vpop.trf.xlu0
        %v778 = vpop.trf.xlu0
        %v779 = vpop.trf.xlu0
        %v780 = vpop.trf.xlu0
        %v781 = vpop.trf.xlu0
        %v782 = vpop.trf.xlu0
        %v783 = vpop.trf.xlu0
        %v784 = vpop.trf.xlu0
        %785 = vxpose.xlu0.b32.start [1/16] %v685, 128
        %786 = vxpose.xlu0.b32.cont [2/16] %v686, 128
        %787 = vxpose.xlu0.b32.cont [3/16] %v687, 128
        %788 = vxpose.xlu0.b32.cont [4/16] %v688, 128
        %789 = vxpose.xlu0.b32.cont [5/16] 0.0, 128
        %790 = vxpose.xlu0.b32.cont [6/16] 0.0, 128
        %791 = vxpose.xlu0.b32.cont [7/16] 0.0, 128
        %792 = vxpose.xlu0.b32.cont [8/16] 0.0, 128
        %793 = vxpose.xlu0.b32.cont [9/16] 0.0, 128
        %794 = vxpose.xlu0.b32.cont [10/16] 0.0, 128
        %795 = vxpose.xlu0.b32.cont [11/16] 0.0, 128
        %796 = vxpose.xlu0.b32.cont [12/16] 0.0, 128
        %797 = vxpose.xlu0.b32.cont [13/16] 0.0, 128
        %798 = vxpose.xlu0.b32.cont [14/16] 0.0, 128
        %799 = vxpose.xlu0.b32.cont [15/16] 0.0, 128
        %800 = vxpose.xlu0.b32.end [16/16] 0.0, 128
        %v801 = vpop.trf.xlu0
        %v802 = vpop.trf.xlu0
        %v803 = vpop.trf.xlu0
        %v804 = vpop.trf.xlu0
        %v805 = vpop.trf.xlu0
        %v806 = vpop.trf.xlu0
        %v807 = vpop.trf.xlu0
        %v808 = vpop.trf.xlu0
        %v809 = vpop.trf.xlu0
        %v810 = vpop.trf.xlu0
        %v811 = vpop.trf.xlu0
        %v812 = vpop.trf.xlu0
        %v813 = vpop.trf.xlu0
        %v814 = vpop.trf.xlu0
        %v815 = vpop.trf.xlu0
        %v816 = vpop.trf.xlu0
        %v818 = vsel %vm439, %v705, 0
        %v821 = vsel %vm439, %v737, 0
        %v824 = vsel %vm439, %v769, 0
        %v827 = vsel %vm439, %v801, 0
        %829 = vmatprep.subr.mxu0 0.0
        %830 = vmatpush1.xpose.msra.mxu0 0.0
        %831 = vmatprep.subr.mxu0 0.0
        %832 = vmatpush1.xpose.msra.mxu0 0.0
        %833 = vmatprep.subr.mxu0 0.0
        %834 = vmatpush1.xpose.msra.mxu0 0.0
        %835 = vmatprep.subr.mxu0 0.0
        %836 = vmatpush1.xpose.msra.mxu0 0.0
        %837 = vmatprep.subr.mxu0 0.0
        %838 = vmatpush1.xpose.msra.mxu0 0.0
        %839 = vmatprep.subr.mxu0 0.0
        %840 = vmatpush1.xpose.msra.mxu0 0.0
        %841 = vmatprep.subr.mxu0 0.0
        %842 = vmatpush1.xpose.msra.mxu0 0.0
        %843 = vmatprep.subr.mxu0 0.0
        %844 = vmatpush1.xpose.msra.mxu0 0.0
        %845 = vmatprep.subr.mxu0 0.0
        %846 = vmatpush1.xpose.msra.mxu0 0.0
        %847 = vmatprep.subr.mxu0 0.0
        %848 = vmatpush1.xpose.msra.mxu0 0.0
        %849 = vmatprep.subr.mxu0 0.0
        %850 = vmatpush1.xpose.msra.mxu0 0.0
        %851 = vmatprep.subr.mxu0 0.0
        %852 = vmatpush1.xpose.msra.mxu0 0.0
        %853 = vmatprep.subr.mxu0 0.0
        %854 = vmatpush1.xpose.msra.mxu0 0.0
        %855 = vmatprep.subr.mxu0 0.0
        %856 = vmatpush1.xpose.msra.mxu0 0.0
        %857 = vmatprep.subr.mxu0 0.0
        %858 = vmatpush1.xpose.msra.mxu0 0.0
        %859 = vmatprep.subr.mxu0 0.0
        %860 = vmatpush1.xpose.msra.mxu0 %v453
        %861 = vmatprep.subr.mxu0 0.0
        %862 = vmatpush2.xpose.msra.mxu0 0.0
        %863 = vmatprep.subr.mxu0 0.0
        %864 = vmatpush2.xpose.msra.mxu0 0.0
        %865 = vmatprep.subr.mxu0 0.0
        %866 = vmatpush2.xpose.msra.mxu0 0.0
        %867 = vmatprep.subr.mxu0 0.0
        %868 = vmatpush2.xpose.msra.mxu0 0.0
        %869 = vmatprep.subr.mxu0 0.0
        %870 = vmatpush2.xpose.msra.mxu0 0.0
        %871 = vmatprep.subr.mxu0 0.0
        %872 = vmatpush2.xpose.msra.mxu0 0.0
        %873 = vmatprep.subr.mxu0 0.0
        %874 = vmatpush2.xpose.msra.mxu0 0.0
        %875 = vmatprep.subr.mxu0 0.0
        %876 = vmatpush2.xpose.msra.mxu0 0.0
        %877 = vmatprep.subr.mxu0 0.0
        %878 = vmatpush2.xpose.msra.mxu0 0.0
        %879 = vmatprep.subr.mxu0 0.0
        %880 = vmatpush2.xpose.msra.mxu0 0.0
        %881 = vmatprep.subr.mxu0 0.0
        %882 = vmatpush2.xpose.msra.mxu0 0.0
        %883 = vmatprep.subr.mxu0 0.0
        %884 = vmatpush2.xpose.msra.mxu0 0.0
        %885 = vmatprep.subr.mxu0 0.0
        %886 = vmatpush2.xpose.msra.mxu0 0.0
        %887 = vmatprep.subr.mxu0 0.0
        %888 = vmatpush2.xpose.msra.mxu0 0.0
        %889 = vmatprep.subr.mxu0 0.0
        %890 = vmatpush2.xpose.msra.mxu0 0.0
        %891 = vmatprep.subr.mxu0 0.0
        %892 = vmatpush2.xpose.msra.mxu0 0.0
        %893 = vmatprep.mubr.f32.mxu0 0.0
        %894 = vmatmul.mubr.f32.gmra.mxu0 %v818
        %v895 = vpop.f32.mrf.mxu0
        %v896 = vadd.f32 0.0, %v895
        %v897 = vpop.f32.mrf.mxu0
        %898 = vmatprep.mubr.f32.mxu0 0.0
        %899 = vmatmul.mubr.f32.gmra.mxu0 %v821
        %v900 = vpop.f32.mrf.mxu0
        %v901 = vadd.f32 0.0, %v900
        %v902 = vpop.f32.mrf.mxu0
        %903 = vmatprep.mubr.f32.mxu0 0.0
        %904 = vmatmul.mubr.f32.gmra.mxu0 %v824
        %v905 = vpop.f32.mrf.mxu0
        %v906 = vadd.f32 0.0, %v905
        %v907 = vpop.f32.mrf.mxu0
        %908 = vmatprep.mubr.f32.mxu0 0.0
        %909 = vmatmul.mubr.f32.gmra.mxu0 %v827
        %v910 = vpop.f32.mrf.mxu0
        %v911 = vadd.f32 0.0, %v910
        %v912 = vpop.f32.mrf.mxu0
        %913 = vdwg.mxu0
        %914 = vxpose.xlu0.b32.start [1/16] %v896, 128
        %915 = vxpose.xlu0.b32.cont [2/16] 0.0, 128
        %916 = vxpose.xlu0.b32.cont [3/16] 0.0, 128
        %917 = vxpose.xlu0.b32.cont [4/16] 0.0, 128
        %918 = vxpose.xlu0.b32.cont [5/16] 0.0, 128
        %919 = vxpose.xlu0.b32.cont [6/16] 0.0, 128
        %920 = vxpose.xlu0.b32.cont [7/16] 0.0, 128
        %921 = vxpose.xlu0.b32.cont [8/16] 0.0, 128
        %922 = vxpose.xlu0.b32.cont [9/16] 0.0, 128
        %923 = vxpose.xlu0.b32.cont [10/16] 0.0, 128
        %924 = vxpose.xlu0.b32.cont [11/16] 0.0, 128
        %925 = vxpose.xlu0.b32.cont [12/16] 0.0, 128
        %926 = vxpose.xlu0.b32.cont [13/16] 0.0, 128
        %927 = vxpose.xlu0.b32.cont [14/16] 0.0, 128
        %928 = vxpose.xlu0.b32.cont [15/16] 0.0, 128
        %929 = vxpose.xlu0.b32.end [16/16] 0.0, 128
        %v930 = vpop.trf.xlu0
        %v931 = vpop.trf.xlu0
        %v932 = vpop.trf.xlu0
        %v933 = vpop.trf.xlu0
        %v934 = vpop.trf.xlu0
        %v935 = vpop.trf.xlu0
        %v936 = vpop.trf.xlu0
        %v937 = vpop.trf.xlu0
        %v938 = vpop.trf.xlu0
        %v939 = vpop.trf.xlu0
        %v940 = vpop.trf.xlu0
        %v941 = vpop.trf.xlu0
        %v942 = vpop.trf.xlu0
        %v943 = vpop.trf.xlu0
        %v944 = vpop.trf.xlu0
        %v945 = vpop.trf.xlu0
        %946 = vxpose.xlu0.b32.start [1/16] %v901, 128
        %947 = vxpose.xlu0.b32.cont [2/16] 0.0, 128
        %948 = vxpose.xlu0.b32.cont [3/16] 0.0, 128
        %949 = vxpose.xlu0.b32.cont [4/16] 0.0, 128
        %950 = vxpose.xlu0.b32.cont [5/16] 0.0, 128
        %951 = vxpose.xlu0.b32.cont [6/16] 0.0, 128
        %952 = vxpose.xlu0.b32.cont [7/16] 0.0, 128
        %953 = vxpose.xlu0.b32.cont [8/16] 0.0, 128
        %954 = vxpose.xlu0.b32.cont [9/16] 0.0, 128
        %955 = vxpose.xlu0.b32.cont [10/16] 0.0, 128
        %956 = vxpose.xlu0.b32.cont [11/16] 0.0, 128
        %957 = vxpose.xlu0.b32.cont [12/16] 0.0, 128
        %958 = vxpose.xlu0.b32.cont [13/16] 0.0, 128
        %959 = vxpose.xlu0.b32.cont [14/16] 0.0, 128
        %960 = vxpose.xlu0.b32.cont [15/16] 0.0, 128
        %961 = vxpose.xlu0.b32.end [16/16] 0.0, 128
        %v962 = vpop.trf.xlu0
        %v963 = vpop.trf.xlu0
        %v964 = vpop.trf.xlu0
        %v965 = vpop.trf.xlu0
        %v966 = vpop.trf.xlu0
        %v967 = vpop.trf.xlu0
        %v968 = vpop.trf.xlu0
        %v969 = vpop.trf.xlu0
        %v970 = vpop.trf.xlu0
        %v971 = vpop.trf.xlu0
        %v972 = vpop.trf.xlu0
        %v973 = vpop.trf.xlu0
        %v974 = vpop.trf.xlu0
        %v975 = vpop.trf.xlu0
        %v976 = vpop.trf.xlu0
        %v977 = vpop.trf.xlu0
        %978 = vxpose.xlu0.b32.start [1/16] %v906, 128
        %979 = vxpose.xlu0.b32.cont [2/16] 0.0, 128
        %980 = vxpose.xlu0.b32.cont [3/16] 0.0, 128
        %981 = vxpose.xlu0.b32.cont [4/16] 0.0, 128
        %982 = vxpose.xlu0.b32.cont [5/16] 0.0, 128
        %983 = vxpose.xlu0.b32.cont [6/16] 0.0, 128
        %984 = vxpose.xlu0.b32.cont [7/16] 0.0, 128
        %985 = vxpose.xlu0.b32.cont [8/16] 0.0, 128
        %986 = vxpose.xlu0.b32.cont [9/16] 0.0, 128
        %987 = vxpose.xlu0.b32.cont [10/16] 0.0, 128
        %988 = vxpose.xlu0.b32.cont [11/16] 0.0, 128
        %989 = vxpose.xlu0.b32.cont [12/16] 0.0, 128
        %990 = vxpose.xlu0.b32.cont [13/16] 0.0, 128
        %991 = vxpose.xlu0.b32.cont [14/16] 0.0, 128
        %992 = vxpose.xlu0.b32.cont [15/16] 0.0, 128
        %993 = vxpose.xlu0.b32.end [16/16] 0.0, 128
        %v994 = vpop.trf.xlu0
        %v995 = vpop.trf.xlu0
        %v996 = vpop.trf.xlu0
        %v997 = vpop.trf.xlu0
        %v998 = vpop.trf.xlu0
        %v999 = vpop.trf.xlu0
        %v1000 = vpop.trf.xlu0
        %v1001 = vpop.trf.xlu0
        %v1002 = vpop.trf.xlu0
        %v1003 = vpop.trf.xlu0
        %v1004 = vpop.trf.xlu0
        %v1005 = vpop.trf.xlu0
        %v1006 = vpop.trf.xlu0
        %v1007 = vpop.trf.xlu0
        %v1008 = vpop.trf.xlu0
        %v1009 = vpop.trf.xlu0
        %1010 = vxpose.xlu0.b32.start [1/16] %v911, 128
        %1011 = vxpose.xlu0.b32.cont [2/16] 0.0, 128
        %1012 = vxpose.xlu0.b32.cont [3/16] 0.0, 128
        %1013 = vxpose.xlu0.b32.cont [4/16] 0.0, 128
        %1014 = vxpose.xlu0.b32.cont [5/16] 0.0, 128
        %1015 = vxpose.xlu0.b32.cont [6/16] 0.0, 128
        %1016 = vxpose.xlu0.b32.cont [7/16] 0.0, 128
        %1017 = vxpose.xlu0.b32.cont [8/16] 0.0, 128
        %1018 = vxpose.xlu0.b32.cont [9/16] 0.0, 128
        %1019 = vxpose.xlu0.b32.cont [10/16] 0.0, 128
        %1020 = vxpose.xlu0.b32.cont [11/16] 0.0, 128
        %1021 = vxpose.xlu0.b32.cont [12/16] 0.0, 128
        %1022 = vxpose.xlu0.b32.cont [13/16] 0.0, 128
        %1023 = vxpose.xlu0.b32.cont [14/16] 0.0, 128
        %1024 = vxpose.xlu0.b32.cont [15/16] 0.0, 128
        %1025 = vxpose.xlu0.b32.end [16/16] 0.0, 128
        %v1026 = vpop.trf.xlu0
        %v1027 = vpop.trf.xlu0
        %v1028 = vpop.trf.xlu0
        %v1029 = vpop.trf.xlu0
        %v1030 = vpop.trf.xlu0
        %v1031 = vpop.trf.xlu0
        %v1032 = vpop.trf.xlu0
        %v1033 = vpop.trf.xlu0
        %v1034 = vpop.trf.xlu0
        %v1035 = vpop.trf.xlu0
        %v1036 = vpop.trf.xlu0
        %v1037 = vpop.trf.xlu0
        %v1038 = vpop.trf.xlu0
        %v1039 = vpop.trf.xlu0
        %v1040 = vpop.trf.xlu0
        %v1041 = vpop.trf.xlu0
        %1042 = vst.msk [vmem:[%s279] sm:$0xff] %vm668, %v930
        %1043 = vst.msk [vmem:[%s279 + $0x8] sm:$0xff] %vm668, %v962
        %1044 = vst.msk [vmem:[%s279 + $0x10] sm:$0xff] %vm668, %v994
        %1045 = vst.msk [vmem:[%s279 + $0x18] sm:$0xff] %vm668, %v1026
        %v1046 = vld [vmem:[%s3] sm:$0xff]
        %v1047 = vld [vmem:[%s3 + $0x8] sm:$0xff]
        %v1048 = vld [vmem:[%s3 + $0x10] sm:$0xff]
        %v1049 = vld [vmem:[%s3 + $0x18] sm:$0xff]
        %v1050 = vld [vmem:[%s3 + $0x20] sm:$0xff]
        %v1051 = vld [vmem:[%s3 + $0x28] sm:$0xff]
        %v1052 = vld [vmem:[%s3 + $0x30] sm:$0xff]
        %v1053 = vld [vmem:[%s3 + $0x38] sm:$0xff]
        %v1054 = vld [vmem:[%s3 + $0x40] sm:$0xff]
        %v1055 = vld [vmem:[%s3 + $0x48] sm:$0xff]
        %v1056 = vld [vmem:[%s3 + $0x50] sm:$0xff]
        %v1057 = vld [vmem:[%s3 + $0x58] sm:$0xff]
        %v1058 = vld [vmem:[%s3 + $0x60] sm:$0xff]
        %v1059 = vld [vmem:[%s3 + $0x68] sm:$0xff]
        %v1060 = vld [vmem:[%s3 + $0x70] sm:$0xff]
        %v1061 = vld [vmem:[%s3 + $0x78] sm:$0xff]
        %1062 = vxpose.xlu0.b32.start [1/16] %v1046, 128
        %1063 = vxpose.xlu0.b32.cont [2/16] %v1047, 128
        %1064 = vxpose.xlu0.b32.cont [3/16] %v1048, 128
        %1065 = vxpose.xlu0.b32.cont [4/16] %v1049, 128
        %1066 = vxpose.xlu0.b32.cont [5/16] 0.0, 128
        %1067 = vxpose.xlu0.b32.cont [6/16] 0.0, 128
        %1068 = vxpose.xlu0.b32.cont [7/16] 0.0, 128
        %1069 = vxpose.xlu0.b32.cont [8/16] 0.0, 128
        %1070 = vxpose.xlu0.b32.cont [9/16] 0.0, 128
        %1071 = vxpose.xlu0.b32.cont [10/16] 0.0, 128
        %1072 = vxpose.xlu0.b32.cont [11/16] 0.0, 128
        %1073 = vxpose.xlu0.b32.cont [12/16] 0.0, 128
        %1074 = vxpose.xlu0.b32.cont [13/16] 0.0, 128
        %1075 = vxpose.xlu0.b32.cont [14/16] 0.0, 128
        %1076 = vxpose.xlu0.b32.cont [15/16] 0.0, 128
        %1077 = vxpose.xlu0.b32.end [16/16] 0.0, 128
        %v1078 = vpop.trf.xlu0
        %v1079 = vpop.trf.xlu0
        %v1080 = vpop.trf.xlu0
        %v1081 = vpop.trf.xlu0
        %v1082 = vpop.trf.xlu0
        %v1083 = vpop.trf.xlu0
        %v1084 = vpop.trf.xlu0
        %v1085 = vpop.trf.xlu0
        %v1086 = vpop.trf.xlu0
        %v1087 = vpop.trf.xlu0
        %v1088 = vpop.trf.xlu0
        %v1089 = vpop.trf.xlu0
        %v1090 = vpop.trf.xlu0
        %v1091 = vpop.trf.xlu0
        %v1092 = vpop.trf.xlu0
        %v1093 = vpop.trf.xlu0
        %1094 = vxpose.xlu0.b32.start [1/16] %v1050, 128
        %1095 = vxpose.xlu0.b32.cont [2/16] %v1051, 128
        %1096 = vxpose.xlu0.b32.cont [3/16] %v1052, 128
        %1097 = vxpose.xlu0.b32.cont [4/16] %v1053, 128
        %1098 = vxpose.xlu0.b32.cont [5/16] 0.0, 128
        %1099 = vxpose.xlu0.b32.cont [6/16] 0.0, 128
        %1100 = vxpose.xlu0.b32.cont [7/16] 0.0, 128
        %1101 = vxpose.xlu0.b32.cont [8/16] 0.0, 128
        %1102 = vxpose.xlu0.b32.cont [9/16] 0.0, 128
        %1103 = vxpose.xlu0.b32.cont [10/16] 0.0, 128
        %1104 = vxpose.xlu0.b32.cont [11/16] 0.0, 128
        %1105 = vxpose.xlu0.b32.cont [12/16] 0.0, 128
        %1106 = vxpose.xlu0.b32.cont [13/16] 0.0, 128
        %1107 = vxpose.xlu0.b32.cont [14/16] 0.0, 128
        %1108 = vxpose.xlu0.b32.cont [15/16] 0.0, 128
        %1109 = vxpose.xlu0.b32.end [16/16] 0.0, 128
        %v1110 = vpop.trf.xlu0
        %v1111 = vpop.trf.xlu0
        %v1112 = vpop.trf.xlu0
        %v1113 = vpop.trf.xlu0
        %v1114 = vpop.trf.xlu0
        %v1115 = vpop.trf.xlu0
        %v1116 = vpop.trf.xlu0
        %v1117 = vpop.trf.xlu0
        %v1118 = vpop.trf.xlu0
        %v1119 = vpop.trf.xlu0
        %v1120 = vpop.trf.xlu0
        %v1121 = vpop.trf.xlu0
        %v1122 = vpop.trf.xlu0
        %v1123 = vpop.trf.xlu0
        %v1124 = vpop.trf.xlu0
        %v1125 = vpop.trf.xlu0
        %1126 = vxpose.xlu0.b32.start [1/16] %v1054, 128
        %1127 = vxpose.xlu0.b32.cont [2/16] %v1055, 128
        %1128 = vxpose.xlu0.b32.cont [3/16] %v1056, 128
        %1129 = vxpose.xlu0.b32.cont [4/16] %v1057, 128
        %1130 = vxpose.xlu0.b32.cont [5/16] 0.0, 128
        %1131 = vxpose.xlu0.b32.cont [6/16] 0.0, 128
        %1132 = vxpose.xlu0.b32.cont [7/16] 0.0, 128
        %1133 = vxpose.xlu0.b32.cont [8/16] 0.0, 128
        %1134 = vxpose.xlu0.b32.cont [9/16] 0.0, 128
        %1135 = vxpose.xlu0.b32.cont [10/16] 0.0, 128
        %1136 = vxpose.xlu0.b32.cont [11/16] 0.0, 128
        %1137 = vxpose.xlu0.b32.cont [12/16] 0.0, 128
        %1138 = vxpose.xlu0.b32.cont [13/16] 0.0, 128
        %1139 = vxpose.xlu0.b32.cont [14/16] 0.0, 128
        %1140 = vxpose.xlu0.b32.cont [15/16] 0.0, 128
        %1141 = vxpose.xlu0.b32.end [16/16] 0.0, 128
        %v1142 = vpop.trf.xlu0
        %v1143 = vpop.trf.xlu0
        %v1144 = vpop.trf.xlu0
        %v1145 = vpop.trf.xlu0
        %v1146 = vpop.trf.xlu0
        %v1147 = vpop.trf.xlu0
        %v1148 = vpop.trf.xlu0
        %v1149 = vpop.trf.xlu0
        %v1150 = vpop.trf.xlu0
        %v1151 = vpop.trf.xlu0
        %v1152 = vpop.trf.xlu0
        %v1153 = vpop.trf.xlu0
        %v1154 = vpop.trf.xlu0
        %v1155 = vpop.trf.xlu0
        %v1156 = vpop.trf.xlu0
        %v1157 = vpop.trf.xlu0
        %1158 = vxpose.xlu0.b32.start [1/16] %v1058, 128
        %1159 = vxpose.xlu0.b32.cont [2/16] %v1059, 128
        %1160 = vxpose.xlu0.b32.cont [3/16] %v1060, 128
        %1161 = vxpose.xlu0.b32.cont [4/16] %v1061, 128
        %1162 = vxpose.xlu0.b32.cont [5/16] 0.0, 128
        %1163 = vxpose.xlu0.b32.cont [6/16] 0.0, 128
        %1164 = vxpose.xlu0.b32.cont [7/16] 0.0, 128
        %1165 = vxpose.xlu0.b32.cont [8/16] 0.0, 128
        %1166 = vxpose.xlu0.b32.cont [9/16] 0.0, 128
        %1167 = vxpose.xlu0.b32.cont [10/16] 0.0, 128
        %1168 = vxpose.xlu0.b32.cont [11/16] 0.0, 128
        %1169 = vxpose.xlu0.b32.cont [12/16] 0.0, 128
        %1170 = vxpose.xlu0.b32.cont [13/16] 0.0, 128
        %1171 = vxpose.xlu0.b32.cont [14/16] 0.0, 128
        %1172 = vxpose.xlu0.b32.cont [15/16] 0.0, 128
        %1173 = vxpose.xlu0.b32.end [16/16] 0.0, 128
        %v1174 = vpop.trf.xlu0
        %v1175 = vpop.trf.xlu0
        %v1176 = vpop.trf.xlu0
        %v1177 = vpop.trf.xlu0
        %v1178 = vpop.trf.xlu0
        %v1179 = vpop.trf.xlu0
        %v1180 = vpop.trf.xlu0
        %v1181 = vpop.trf.xlu0
        %v1182 = vpop.trf.xlu0
        %v1183 = vpop.trf.xlu0
        %v1184 = vpop.trf.xlu0
        %v1185 = vpop.trf.xlu0
        %v1186 = vpop.trf.xlu0
        %v1187 = vpop.trf.xlu0
        %v1188 = vpop.trf.xlu0
        %v1189 = vpop.trf.xlu0
        %v1191 = vsel %vm439, %v1078, 0
        %v1194 = vsel %vm439, %v1110, 0
        %v1197 = vsel %vm439, %v1142, 0
        %v1200 = vsel %vm439, %v1174, 0
        %1202 = vmatprep.subr.mxu0 0.0
        %1203 = vmatpush1.xpose.msra.mxu0 0.0
        %1204 = vmatprep.subr.mxu0 0.0
        %1205 = vmatpush1.xpose.msra.mxu0 0.0
        %1206 = vmatprep.subr.mxu0 0.0
        %1207 = vmatpush1.xpose.msra.mxu0 0.0
        %1208 = vmatprep.subr.mxu0 0.0
        %1209 = vmatpush1.xpose.msra.mxu0 0.0
        %1210 = vmatprep.subr.mxu0 0.0
        %1211 = vmatpush1.xpose.msra.mxu0 0.0
        %1212 = vmatprep.subr.mxu0 0.0
        %1213 = vmatpush1.xpose.msra.mxu0 0.0
        %1214 = vmatprep.subr.mxu0 0.0
        %1215 = vmatpush1.xpose.msra.mxu0 0.0
        %1216 = vmatprep.subr.mxu0 0.0
        %1217 = vmatpush1.xpose.msra.mxu0 0.0
        %1218 = vmatprep.subr.mxu0 0.0
        %1219 = vmatpush1.xpose.msra.mxu0 0.0
        %1220 = vmatprep.subr.mxu0 0.0
        %1221 = vmatpush1.xpose.msra.mxu0 0.0
        %1222 = vmatprep.subr.mxu0 0.0
        %1223 = vmatpush1.xpose.msra.mxu0 0.0
        %1224 = vmatprep.subr.mxu0 0.0
        %1225 = vmatpush1.xpose.msra.mxu0 0.0
        %1226 = vmatprep.subr.mxu0 0.0
        %1227 = vmatpush1.xpose.msra.mxu0 0.0
        %1228 = vmatprep.subr.mxu0 0.0
        %1229 = vmatpush1.xpose.msra.mxu0 0.0
        %1230 = vmatprep.subr.mxu0 0.0
        %1231 = vmatpush1.xpose.msra.mxu0 0.0
        %1232 = vmatprep.subr.mxu0 0.0
        %1233 = vmatpush1.xpose.msra.mxu0 %v453
        %1234 = vmatprep.subr.mxu0 0.0
        %1235 = vmatpush2.xpose.msra.mxu0 0.0
        %1236 = vmatprep.subr.mxu0 0.0
        %1237 = vmatpush2.xpose.msra.mxu0 0.0
        %1238 = vmatprep.subr.mxu0 0.0
        %1239 = vmatpush2.xpose.msra.mxu0 0.0
        %1240 = vmatprep.subr.mxu0 0.0
        %1241 = vmatpush2.xpose.msra.mxu0 0.0
        %1242 = vmatprep.subr.mxu0 0.0
        %1243 = vmatpush2.xpose.msra.mxu0 0.0
        %1244 = vmatprep.subr.mxu0 0.0
        %1245 = vmatpush2.xpose.msra.mxu0 0.0
        %1246 = vmatprep.subr.mxu0 0.0
        %1247 = vmatpush2.xpose.msra.mxu0 0.0
        %1248 = vmatprep.subr.mxu0 0.0
        %1249 = vmatpush2.xpose.msra.mxu0 0.0
        %1250 = vmatprep.subr.mxu0 0.0
        %1251 = vmatpush2.xpose.msra.mxu0 0.0
        %1252 = vmatprep.subr.mxu0 0.0
        %1253 = vmatpush2.xpose.msra.mxu0 0.0
        %1254 = vmatprep.subr.mxu0 0.0
        %1255 = vmatpush2.xpose.msra.mxu0 0.0
        %1256 = vmatprep.subr.mxu0 0.0
        %1257 = vmatpush2.xpose.msra.mxu0 0.0
        %1258 = vmatprep.subr.mxu0 0.0
        %1259 = vmatpush2.xpose.msra.mxu0 0.0
        %1260 = vmatprep.subr.mxu0 0.0
        %1261 = vmatpush2.xpose.msra.mxu0 0.0
        %1262 = vmatprep.subr.mxu0 0.0
        %1263 = vmatpush2.xpose.msra.mxu0 0.0
        %1264 = vmatprep.subr.mxu0 0.0
        %1265 = vmatpush2.xpose.msra.mxu0 0.0
        %1266 = vmatprep.mubr.f32.mxu0 0.0
        %1267 = vmatmul.mubr.f32.gmra.mxu0 %v1191
        %v1268 = vpop.f32.mrf.mxu0
        %v1269 = vadd.f32 0.0, %v1268
        %v1270 = vpop.f32.mrf.mxu0
        %1271 = vmatprep.mubr.f32.mxu0 0.0
        %1272 = vmatmul.mubr.f32.gmra.mxu0 %v1194
        %v1273 = vpop.f32.mrf.mxu0
        %v1274 = vadd.f32 0.0, %v1273
        %v1275 = vpop.f32.mrf.mxu0
        %1276 = vmatprep.mubr.f32.mxu0 0.0
        %1277 = vmatmul.mubr.f32.gmra.mxu0 %v1197
        %v1278 = vpop.f32.mrf.mxu0
        %v1279 = vadd.f32 0.0, %v1278
        %v1280 = vpop.f32.mrf.mxu0
        %1281 = vmatprep.mubr.f32.mxu0 0.0
        %1282 = vmatmul.mubr.f32.gmra.mxu0 %v1200
        %v1283 = vpop.f32.mrf.mxu0
        %v1284 = vadd.f32 0.0, %v1283
        %v1285 = vpop.f32.mrf.mxu0
        %1286 = vdwg.mxu0
        %1287 = vxpose.xlu0.b32.start [1/16] %v1269, 128
        %1288 = vxpose.xlu0.b32.cont [2/16] 0.0, 128
        %1289 = vxpose.xlu0.b32.cont [3/16] 0.0, 128
        %1290 = vxpose.xlu0.b32.cont [4/16] 0.0, 128
        %1291 = vxpose.xlu0.b32.cont [5/16] 0.0, 128
        %1292 = vxpose.xlu0.b32.cont [6/16] 0.0, 128
        %1293 = vxpose.xlu0.b32.cont [7/16] 0.0, 128
        %1294 = vxpose.xlu0.b32.cont [8/16] 0.0, 128
        %1295 = vxpose.xlu0.b32.cont [9/16] 0.0, 128
        %1296 = vxpose.xlu0.b32.cont [10/16] 0.0, 128
        %1297 = vxpose.xlu0.b32.cont [11/16] 0.0, 128
        %1298 = vxpose.xlu0.b32.cont [12/16] 0.0, 128
        %1299 = vxpose.xlu0.b32.cont [13/16] 0.0, 128
        %1300 = vxpose.xlu0.b32.cont [14/16] 0.0, 128
        %1301 = vxpose.xlu0.b32.cont [15/16] 0.0, 128
        %1302 = vxpose.xlu0.b32.end [16/16] 0.0, 128
        %v1303 = vpop.trf.xlu0
        %v1304 = vpop.trf.xlu0
        %v1305 = vpop.trf.xlu0
        %v1306 = vpop.trf.xlu0
        %v1307 = vpop.trf.xlu0
        %v1308 = vpop.trf.xlu0
        %v1309 = vpop.trf.xlu0
        %v1310 = vpop.trf.xlu0
        %v1311 = vpop.trf.xlu0
        %v1312 = vpop.trf.xlu0
        %v1313 = vpop.trf.xlu0
        %v1314 = vpop.trf.xlu0
        %v1315 = vpop.trf.xlu0
        %v1316 = vpop.trf.xlu0
        %v1317 = vpop.trf.xlu0
        %v1318 = vpop.trf.xlu0
        %1319 = vxpose.xlu0.b32.start [1/16] %v1274, 128
        %1320 = vxpose.xlu0.b32.cont [2/16] 0.0, 128
        %1321 = vxpose.xlu0.b32.cont [3/16] 0.0, 128
        %1322 = vxpose.xlu0.b32.cont [4/16] 0.0, 128
        %1323 = vxpose.xlu0.b32.cont [5/16] 0.0, 128
        %1324 = vxpose.xlu0.b32.cont [6/16] 0.0, 128
        %1325 = vxpose.xlu0.b32.cont [7/16] 0.0, 128
        %1326 = vxpose.xlu0.b32.cont [8/16] 0.0, 128
        %1327 = vxpose.xlu0.b32.cont [9/16] 0.0, 128
        %1328 = vxpose.xlu0.b32.cont [10/16] 0.0, 128
        %1329 = vxpose.xlu0.b32.cont [11/16] 0.0, 128
        %1330 = vxpose.xlu0.b32.cont [12/16] 0.0, 128
        %1331 = vxpose.xlu0.b32.cont [13/16] 0.0, 128
        %1332 = vxpose.xlu0.b32.cont [14/16] 0.0, 128
        %1333 = vxpose.xlu0.b32.cont [15/16] 0.0, 128
        %1334 = vxpose.xlu0.b32.end [16/16] 0.0, 128
        %v1335 = vpop.trf.xlu0
        %v1336 = vpop.trf.xlu0
        %v1337 = vpop.trf.xlu0
        %v1338 = vpop.trf.xlu0
        %v1339 = vpop.trf.xlu0
        %v1340 = vpop.trf.xlu0
        %v1341 = vpop.trf.xlu0
        %v1342 = vpop.trf.xlu0
        %v1343 = vpop.trf.xlu0
        %v1344 = vpop.trf.xlu0
        %v1345 = vpop.trf.xlu0
        %v1346 = vpop.trf.xlu0
        %v1347 = vpop.trf.xlu0
        %v1348 = vpop.trf.xlu0
        %v1349 = vpop.trf.xlu0
        %v1350 = vpop.trf.xlu0
        %1351 = vxpose.xlu0.b32.start [1/16] %v1279, 128
        %1352 = vxpose.xlu0.b32.cont [2/16] 0.0, 128
        %1353 = vxpose.xlu0.b32.cont [3/16] 0.0, 128
        %1354 = vxpose.xlu0.b32.cont [4/16] 0.0, 128
        %1355 = vxpose.xlu0.b32.cont [5/16] 0.0, 128
        %1356 = vxpose.xlu0.b32.cont [6/16] 0.0, 128
        %1357 = vxpose.xlu0.b32.cont [7/16] 0.0, 128
        %1358 = vxpose.xlu0.b32.cont [8/16] 0.0, 128
        %1359 = vxpose.xlu0.b32.cont [9/16] 0.0, 128
        %1360 = vxpose.xlu0.b32.cont [10/16] 0.0, 128
        %1361 = vxpose.xlu0.b32.cont [11/16] 0.0, 128
        %1362 = vxpose.xlu0.b32.cont [12/16] 0.0, 128
        %1363 = vxpose.xlu0.b32.cont [13/16] 0.0, 128
        %1364 = vxpose.xlu0.b32.cont [14/16] 0.0, 128
        %1365 = vxpose.xlu0.b32.cont [15/16] 0.0, 128
        %1366 = vxpose.xlu0.b32.end [16/16] 0.0, 128
        %v1367 = vpop.trf.xlu0
        %v1368 = vpop.trf.xlu0
        %v1369 = vpop.trf.xlu0
        %v1370 = vpop.trf.xlu0
        %v1371 = vpop.trf.xlu0
        %v1372 = vpop.trf.xlu0
        %v1373 = vpop.trf.xlu0
        %v1374 = vpop.trf.xlu0
        %v1375 = vpop.trf.xlu0
        %v1376 = vpop.trf.xlu0
        %v1377 = vpop.trf.xlu0
        %v1378 = vpop.trf.xlu0
        %v1379 = vpop.trf.xlu0
        %v1380 = vpop.trf.xlu0
        %v1381 = vpop.trf.xlu0
        %v1382 = vpop.trf.xlu0
        %1383 = vxpose.xlu0.b32.start [1/16] %v1284, 128
        %1384 = vxpose.xlu0.b32.cont [2/16] 0.0, 128
        %1385 = vxpose.xlu0.b32.cont [3/16] 0.0, 128
        %1386 = vxpose.xlu0.b32.cont [4/16] 0.0, 128
        %1387 = vxpose.xlu0.b32.cont [5/16] 0.0, 128
        %1388 = vxpose.xlu0.b32.cont [6/16] 0.0, 128
        %1389 = vxpose.xlu0.b32.cont [7/16] 0.0, 128
        %1390 = vxpose.xlu0.b32.cont [8/16] 0.0, 128
        %1391 = vxpose.xlu0.b32.cont [9/16] 0.0, 128
        %1392 = vxpose.xlu0.b32.cont [10/16] 0.0, 128
        %1393 = vxpose.xlu0.b32.cont [11/16] 0.0, 128
        %1394 = vxpose.xlu0.b32.cont [12/16] 0.0, 128
        %1395 = vxpose.xlu0.b32.cont [13/16] 0.0, 128
        %1396 = vxpose.xlu0.b32.cont [14/16] 0.0, 128
        %1397 = vxpose.xlu0.b32.cont [15/16] 0.0, 128
        %1398 = vxpose.xlu0.b32.end [16/16] 0.0, 128
        %v1399 = vpop.trf.xlu0
        %v1400 = vpop.trf.xlu0
        %v1401 = vpop.trf.xlu0
        %v1402 = vpop.trf.xlu0
        %v1403 = vpop.trf.xlu0
        %v1404 = vpop.trf.xlu0
        %v1405 = vpop.trf.xlu0
        %v1406 = vpop.trf.xlu0
        %v1407 = vpop.trf.xlu0
        %v1408 = vpop.trf.xlu0
        %v1409 = vpop.trf.xlu0
        %v1410 = vpop.trf.xlu0
        %v1411 = vpop.trf.xlu0
        %v1412 = vpop.trf.xlu0
        %v1413 = vpop.trf.xlu0
        %v1414 = vpop.trf.xlu0
        %1415 = vst.msk [vmem:[%s286] sm:$0xff] %vm668, %v1303
        %1416 = vst.msk [vmem:[%s286 + $0x8] sm:$0xff] %vm668, %v1335
        %1417 = vst.msk [vmem:[%s286 + $0x10] sm:$0xff] %vm668, %v1367
        %1418 = vst.msk [vmem:[%s286 + $0x18] sm:$0xff] %vm668, %v1399
        %s1419 = sand.u32 %s137, 1
        %s1420 = scalar_lea.sflag [#allocation3], %s1419
        %s1421 = sand.u32 %s137, 1
        %s1422 = smul.addr %s1421, 32
        %s1423 = scalar_lea.vmem [#allocation2], %s1422
        %s1424 = sand.u32 %s24, 1
        %s1425 = scalar_lea.sflag [#allocation5], %s1424
        %s1426 = sand.u32 %s165, 1
        %s1427 = smul.addr %s1426, 32
        %s1428 = scalar_lea.vmem [#allocation4], %s1427
        %s1429 = sand.u32 %s24, 1
        %s1430 = scalar_lea.sflag [#allocation5], %s1429
        %s1431 = sand.u32 %s193, 1
        %s1432 = smul.addr %s1431, 32
        %s1433 = scalar_lea.vmem [#allocation6], %s1432
        // Predicated region
        $region37: #{tpu_custom_call.1} parent=35 // pred_check
          %p1434 = pneg %p147
        $region38: #{tpu_custom_call.1} parent=35 // pred_check_branch
          %1436 = sbr.rel (%p1434) target = $region40
        $region39: #{tpu_custom_call.1} parent=35 // pred_region
          %s1438 = ssub.s32 512, 512
          %1439 = vsyncadd %s1420, %s1438
          %s1440 = smul.addr %s28, 4
          %s1441 = sadd.s32 %s29, %s1440
          %s1442 = smul.addr %s1441, 128
          %s1443 = scalar_lea.hbm %s4, %s1442
          %s1444 = sshll.u32 %s1423, 4
          %s1445 = int_to_ptr.vmem [resolvable:$true] %s1444
          %1450 = dma.vmem_to_hbm [thread:$0]  %s1445, 512, %s1443, %s1420, 128, 128, 8
        $region40: #{tpu_custom_call.1} parent=35 // pred_fallthru
          _
        // Predicated region
        $region41: #{tpu_custom_call.1} parent=35 // pred_check
          %p1451 = pneg %p175
        $region42: #{tpu_custom_call.1} parent=35 // pred_check_branch
          %1453 = sbr.rel (%p1451) target = $region44
        $region43: #{tpu_custom_call.1} parent=35 // pred_region
          %s1455 = ssub.s32 512, 512
          %1456 = vsyncadd %s1425, %s1455
          %s1457 = smul.addr %s28, 4
          %s1458 = sadd.s32 %s29, %s1457
          %s1459 = smul.addr %s1458, 128
          %s1460 = scalar_lea.hbm %s5, %s1459
          %s1461 = sshll.u32 %s1428, 4
          %s1462 = int_to_ptr.vmem [resolvable:$true] %s1461
          %1467 = dma.vmem_to_hbm [thread:$0]  %s1462, 512, %s1460, %s1425, 128, 128, 8
        $region44: #{tpu_custom_call.1} parent=35 // pred_fallthru
          _
        // Predicated region
        $region45: #{tpu_custom_call.1} parent=35 // pred_check
          %p1468 = pneg %p203
        $region46: #{tpu_custom_call.1} parent=35 // pred_check_branch
          %1470 = sbr.rel (%p1468) target = $region48
        $region47: #{tpu_custom_call.1} parent=35 // pred_region
          %s1472 = ssub.s32 512, 512
          %1473 = vsyncadd %s1430, %s1472
          %s1474 = smul.addr %s28, 4
          %s1475 = sadd.s32 %s29, %s1474
          %s1476 = smul.addr %s1475, 128
          %s1477 = scalar_lea.hbm %s6, %s1476
          %s1478 = sshll.u32 %s1433, 4
          %s1479 = int_to_ptr.vmem [resolvable:$true] %s1478
          %1484 = dma.vmem_to_hbm [thread:$0]  %s1479, 512, %s1477, %s1430, 128, 128, 8
        $region48: #{tpu_custom_call.1} parent=35 // pred_fallthru
          _
      $region36: #{tpu_custom_call.1} parent=5 // pred_fallthru
        _
      %p1485 = scmp.le.s32.totalorder 2, %s19
      // Predicated region
      $region49: #{tpu_custom_call.1} parent=5 // pred_check
        %p1486 = pneg %p1485
      $region50: #{tpu_custom_call.1} parent=5 // pred_check_branch
        %1488 = sbr.rel (%p1486) target = $region52
      $region51: #{tpu_custom_call.1} parent=5 // pred_region
        %s1489 = ssub.s32 %s19, 2
        // Predicated region
        $region53: #{tpu_custom_call.1} parent=51 // pred_check
          %p1490 = pneg %p153
        $region54: #{tpu_custom_call.1} parent=51 // pred_check_branch
          %1492 = sbr.rel (%p1490) target = $region56
        $region55: #{tpu_custom_call.1} parent=51 // pred_region
          %s1493 = sand.u32 %s138, 1
          %s1494 = scalar_lea.sflag [#allocation3], %s1493
          %s1495 = sand.u32 %s138, 1
          %s1496 = smul.addr %s1495, 32
          %s1497 = scalar_lea.vmem [#allocation2], %s1496
          %1498 = dma.done %s1494, 512
        $region56: #{tpu_custom_call.1} parent=51 // pred_fallthru
          _
        // Predicated region
        $region57: #{tpu_custom_call.1} parent=51 // pred_check
          %p1499 = pneg %p181
        $region58: #{tpu_custom_call.1} parent=51 // pred_check_branch
          %1501 = sbr.rel (%p1499) target = $region60
        $region59: #{tpu_custom_call.1} parent=51 // pred_region
          %s1502 = sand.u32 %s25, 1
          %s1503 = scalar_lea.sflag [#allocation5], %s1502
          %s1504 = sand.u32 %s166, 1
          %s1505 = smul.addr %s1504, 32
          %s1506 = scalar_lea.vmem [#allocation4], %s1505
          %1507 = dma.done %s1503, 512
        $region60: #{tpu_custom_call.1} parent=51 // pred_fallthru
          _
        // Predicated region
        $region61: #{tpu_custom_call.1} parent=51 // pred_check
          %p1508 = pneg %p209
        $region62: #{tpu_custom_call.1} parent=51 // pred_check_branch
          %1510 = sbr.rel (%p1508) target = $region64
        $region63: #{tpu_custom_call.1} parent=51 // pred_region
          %s1511 = sand.u32 %s25, 1
          %s1512 = scalar_lea.sflag [#allocation5], %s1511
          %s1513 = sand.u32 %s194, 1
          %s1514 = smul.addr %s1513, 32
          %s1515 = scalar_lea.vmem [#allocation6], %s1514
          %1516 = dma.done %s1512, 512
        $region64: #{tpu_custom_call.1} parent=51 // pred_fallthru
          _
      $region52: #{tpu_custom_call.1} parent=5 // pred_fallthru
        _
    $region6: #{tpu_custom_call.1} parent=1 // loop_footer
      %s23 = sadd.s32 1, %s19
    $region7: #{tpu_custom_call.1} parent=1 // loop_footer_branch
      %18 = sbr.rel target = $region3
    $region8: #{tpu_custom_call.1} parent=1 // loop_exit
      _
    %1517 = vsyncpa [#allocation3], 1
    %s1518 = scalar_lea.sflag [#allocation3], 1
    %1519 = vsyncpa %s1518, 1
    %1520 = vsyncpa [#allocation5], 1
    %s1521 = scalar_lea.sflag [#allocation5], 1
    %1522 = vsyncpa %s1521, 1

</llo_original>
